<compile_context>
chip_gen: v7x
topology: tpu7x:2x2x1
jax: 0.10.0
libtpu: 0.0.40
codegen_flags: <defaults>
</compile_context>

<pallas_src>
import functools
import numpy as np

import jax
import jax.numpy as jnp
from jax.experimental import pallas as pl
from jax.experimental.pallas import tpu as pltpu

ENC_OPS = ['conv_2d_1x1', 'conv_2d_3x3', 'conv_2d_5x5', 'conv_2d_7x7',
           'skip_connect', 'sep_conv_3x3', 'sep_conv_5x5', 'sep_conv_7x7',
           'dil_conv_3x3', 'dil_conv_5x5', 'dil_conv_7x7',
           'asym_conv_3x3', 'asym_conv_5x5', 'asym_conv_7x7']


def _round_up(x, m):
    return ((x + m - 1) // m) * m


def _vmem_limit_bytes():
    """Per-chip scoped-VMEM budget (raise on 128 MiB v5e/v6e, safe on 64 MiB v7x)."""
    try:
        cap = int(pltpu.get_tpu_info().vmem_capacity_bytes)
    except Exception:
        cap = 64 * 1024 * 1024        # conservative fallback
    return max(32 * 1024 * 1024, min((cap * 3) // 4, 100 * 1024 * 1024))


_VMEM_LIMIT = _vmem_limit_bytes()


def _compiler_params():
    return pltpu.CompilerParams(
        dimension_semantics=("parallel",),       # batch grid -> both TCs on v7x
        vmem_limit_bytes=_VMEM_LIMIT)


# ----------------------------------------------------------------------------
# Pallas kernels
# ----------------------------------------------------------------------------

def _deconv_taps_kernel(x_ref, w_ref, o_ref):
    """Fused (stem_up ∘ ConvTranspose2d(k=2, s=2)) taps: one MXU matmul / image.

    x_ref: (1, Cin, Hin*Win)  channels-first low-res input (one image)
    w_ref: (4*C, Cin)         resident; row = (kh*2+kw)*C + cout, stem-premultiplied
    o_ref: (1, 4*C, Hin*Win)
    """
    o_ref[0] = jnp.dot(w_ref[...], x_ref[0],
                       preferred_element_type=jnp.float32).astype(o_ref.dtype)


def _dag_kernel(up_ref, skip_ref, wskip_ref, b0_ref, mask_ref, *rest,
                node_defs, final_in):
    """Whole-cell DAG for one image, entirely in VMEM.

    Every node tensor is (C, L) channels-first, L = pad128(Hp*Wp), where
    (Hp, Wp) is the output spatial grid padded by p_max on each side.  A KxK
    conv tap reads the input shifted by (kh-p)*Wp + (kw-p) along the flat lane
    axis (static pltpu.roll); the K*K rolled copies are concatenated (in-VMEM
    im2col) and contracted with the packed (C, K*K*C) weight in one matmul.
    `mask` zeroes the padding ring (and the 128-alignment tail) after every
    node so later taps read correct zero padding.
    """
    out_ref = rest[-1]
    params = rest[:-1]

    mask = mask_ref[...]                                     # (1, L)
    up = up_ref[0].astype(jnp.float32)                       # (C, L)
    sk = skip_ref[0].astype(jnp.float32)                     # (C, L)

    # node 0 = stem_conv(cat([up(inputs), skip])); the up-half of the stem was
    # folded into the deconv taps, only the skip-half 1x1 + fused bias remain.
    node0 = (up
             + jnp.dot(wskip_ref[...].astype(jnp.float32), sk,
                       preferred_element_type=jnp.float32)
             + b0_ref[...].astype(jnp.float32)) * mask
    nodes = [node0]

    pi = 0
    for name, k, shifts, in_nodes in node_defs:
        x = nodes[in_nodes[0]]
        for t in in_nodes[1:]:                               # fused node merge (VPU)
            x = x + nodes[t]
        if name == 'skip_connect':
            nodes.append(x)
            continue
        w = params[pi][...].astype(jnp.float32)
        b = params[pi + 1][...].astype(jnp.float32)
        pi += 2
        if k == 1:
            y = jnp.dot(w, x, preferred_element_type=jnp.float32)
        else:
            cols = jnp.concatenate(                          # in-VMEM im2col (XLU rolls)
                [x if s == 0 else pltpu.roll(x, shift=s, axis=1) for s in shifts],
                axis=0)
            y = jnp.dot(w, cols, preferred_element_type=jnp.float32)
        nodes.append(jnp.maximum(y + b, 0.0) * mask)         # bias + ReLU + re-zero ring

    out = nodes[final_in[0]]
    for t in final_in[1:]:                                   # fused final merge
        out = out + nodes[t]
    out_ref[0] = out.astype(out_ref.dtype)


# ----------------------------------------------------------------------------
# Wrappers
# ----------------------------------------------------------------------------

def _fused_deconv_taps(x_cf, w4):
    """x_cf: (N, Cin, RL) -> (N, 4*C, RL); batch grid, weights resident."""
    N, Cin, RL = x_cf.shape
    C4 = w4.shape[0]
    return pl.pallas_call(
        _deconv_taps_kernel,
        out_shape=jax.ShapeDtypeStruct((N, C4, RL), x_cf.dtype),
        grid=(N,),
        in_specs=[pl.BlockSpec((1, Cin, RL), lambda i: (i, 0, 0)),
                  pl.BlockSpec((C4, Cin), lambda i: (0, 0))],
        out_specs=pl.BlockSpec((1, C4, RL), lambda i: (i, 0, 0)),
        compiler_params=_compiler_params(),
    )(x_cf, w4)


def _init_conv(key, K, cin, cout):
    kw_, kb_ = jax.random.split(key)
    bound = 1.0 / np.sqrt(cin * K * K)
    w = jax.random.uniform(kw_, (K, K, cin, cout), jnp.float32, -bound, bound)
    b = jax.random.uniform(kb_, (cout,), jnp.float32, -bound, bound)
    return w, b


class DecoderCellPallas:
    """Pallas DecoderCell.  Tensors are NHWC at the module boundary."""

    def __init__(self, matrix, ops, prev_C, current_C, key):
        self.matrix = np.asarray(matrix)
        self.ops = list(ops)
        self.prev_C = prev_C
        self.C = current_C
        self.NBR_OP = self.matrix.shape[0] - 1

        keys = list(jax.random.split(key, 3 + (self.NBR_OP - 1)))
        # up: ConvTranspose2d(prev_C -> C, k=2, s=2); stem: Conv2d(2C -> C, k=1)
        self.up_w, self.up_b = _init_conv(keys[0], 2, prev_C, current_C)
        self.stem_w, self.stem_b = _init_conv(keys[1], 1, 2 * current_C, current_C)
        # final_stem_conv exists in the reference __init__ but is unused in forward()
        self.final_stem_w, self.final_stem_b = _init_conv(
            keys[2], 1, current_C * (self.NBR_OP - 1), current_C)

        # ---- trace-time fold: stem's "up" half into the deconv taps ----------
        w_s1 = self.stem_w[0, 0, :current_C, :].T        # (C, C)  up channels
        w_s2 = self.stem_w[0, 0, current_C:, :].T        # (C, C)  skip channels
        #   Wf[kh,kw,co,cp] = sum_c w_s1[co,c] * up_w[kh,kw,cp,c]
        self.w_up_fused = jnp.einsum('oc,hwpc->hwop', w_s1, self.up_w).reshape(
            4 * current_C, prev_C)
        self.w_skip = w_s2
        self.b0 = (w_s1 @ self.up_b + self.stem_b).reshape(current_C, 1)

        # ---- per-node NAS ops --------------------------------------------------
        self.node_names, self.node_ks, self.node_params = [], [], []
        for op_idx in range(1, self.NBR_OP):
            name = ENC_OPS[self.ops[op_idx - 1]]
            self.node_names.append(name)
            if name.startswith('conv_2d_'):
                K = int(name.split('_')[-1].split('x')[0])
                w, b = _init_conv(keys[2 + op_idx], K, current_C, current_C)
                # pack: column index (kh*K+kw)*Cin + cin  -> matches in-kernel
                # roll/concat order.
                w_pack = jnp.transpose(w, (3, 0, 1, 2)).reshape(
                    current_C, K * K * current_C)
                self.node_ks.append(K)
                self.node_params.append((w_pack, b.reshape(current_C, 1)))
            elif name == 'skip_connect':
                self.node_ks.append(0)
                self.node_params.append(None)
            else:
                # TODO(synk): sep_conv_* / dil_conv_* / asym_conv_* come from an
                # external ops_dict not included in the source; not implemented.
                raise NotImplementedError(name)

        self.p_max = max([(k - 1) // 2 for k in self.node_ks if k > 0], default=0)

    def __call__(self, inputs, skip):
        N, Hin, Win, _ = inputs.shape
        C = self.C
        H, W = 2 * Hin, 2 * Win
        p = self.p_max
        Hp, Wp = H + 2 * p, W + 2 * p
        L = _round_up(Hp * Wp, 128)              # lane-dense (128-multiple) axis

        # ---- kernel 1: fused (stem ∘ up) transpose-conv taps ------------------
        x_cf = jnp.transpose(inputs, (0, 3, 1, 2)).reshape(N, self.prev_C, Hin * Win)
        up4 = _fused_deconv_taps(x_cf, self.w_up_fused)          # (N, 4C, Hin*Win)

        # Interleave taps (one small XLA pass) and pad to the canonical layout.
        # TODO(synk): the interleave could move in-kernel with strided lane stores
        # so this call fuses into the DAG kernel as well.
        up_full = jnp.transpose(up4.reshape(N, 2, 2, C, Hin, Win),
                                (0, 3, 4, 1, 5, 2)).reshape(N, C, H, W)
        up_pad = jnp.pad(up_full, ((0, 0), (0, 0), (p, p), (p, p)))
        up_pad = jnp.pad(up_pad.reshape(N, C, Hp * Wp),
                         ((0, 0), (0, 0), (0, L - Hp * Wp)))
        skip_pad = jnp.pad(jnp.transpose(skip, (0, 3, 1, 2)),
                           ((0, 0), (0, 0), (p, p), (p, p)))
        skip_pad = jnp.pad(skip_pad.reshape(N, C, Hp * Wp),
                           ((0, 0), (0, 0), (0, L - Hp * Wp)))

        # interior mask: 1 inside the true HxW window, 0 on the pad ring / tail
        m = np.zeros((Hp, Wp), np.float32)
        m[p:p + H, p:p + W] = 1.0
        mask = jnp.asarray(np.pad(m.reshape(-1), (0, L - Hp * Wp)).reshape(1, L))

        # ---- static DAG description + packed params ---------------------------
        node_defs, params = [], []
        for j in range(1, self.NBR_OP):
            in_nodes = tuple(int(t) for t in np.where(self.matrix[:, j] == 1)[0])
            name, K = self.node_names[j - 1], self.node_ks[j - 1]
            if name == 'skip_connect':
                node_defs.append((name, 0, (), in_nodes))
            else:
                pk = (K - 1) // 2
                # rolled[:, q] = x[:, q + (kh-pk)*Wp + (kw-pk)]  (wrap lands in mask=0)
                shifts = tuple((-((kh - pk) * Wp + (kw - pk))) % L
                               for kh in range(K) for kw in range(K))
                node_defs.append((name, K, shifts, in_nodes))
                w_pack, b_col = self.node_params[j - 1]
                params += [w_pack, b_col]
        final_in = tuple(int(t) for t in
                         np.where(self.matrix[:, self.NBR_OP] == 1)[0])

        in_specs = [pl.BlockSpec((1, C, L), lambda i: (i, 0, 0)),    # up_pad
                    pl.BlockSpec((1, C, L), lambda i: (i, 0, 0)),    # skip_pad
                    pl.BlockSpec((C, C), lambda i: (0, 0)),          # w_skip (resident)
                    pl.BlockSpec((C, 1), lambda i: (0, 0)),          # b0     (resident)
                    pl.BlockSpec((1, L), lambda i: (0, 0))]          # mask   (resident)
        in_specs += [pl.BlockSpec(prm.shape, lambda i: (0, 0)) for prm in params]

        out = pl.pallas_call(
            functools.partial(_dag_kernel, node_defs=tuple(node_defs),
                              final_in=final_in),
            out_shape=jax.ShapeDtypeStruct((N, C, L), inputs.dtype),
            grid=(N,),
            in_specs=in_specs,
            out_specs=pl.BlockSpec((1, C, L), lambda i: (i, 0, 0)),
            compiler_params=_compiler_params(),
        )(up_pad, skip_pad, self.w_skip, self.b0, mask, *params)

        # back to NHWC exactly once, at the cell exit
        out = out[:, :, :Hp * Wp].reshape(N, C, Hp, Wp)[:, :, p:p + H, p:p + W]
        return jnp.transpose(out, (0, 2, 3, 1))


if __name__ == "__main__":
    key = jax.random.PRNGKey(0)
    N, prev_C, current_C = 2, 8, 8
    Hin, Win = 8, 8                        # decoder upsamples 8x8 -> 16x16

    # 5x5 DAG matrix => NBR_OP = 4, three intermediate NAS ops.
    matrix = np.array([
        [0, 1, 1, 0, 0],
        [0, 0, 1, 1, 0],
        [0, 0, 0, 1, 1],
        [0, 0, 0, 0, 1],
        [0, 0, 0, 0, 0],
    ], dtype=np.int32)
    ops = [1, 4, 0]                        # conv_2d_3x3, skip_connect, conv_2d_1x1

    k_cell, k_x, k_skip = jax.random.split(key, 3)
    cell = DecoderCellPallas(matrix, ops, prev_C, current_C, k_cell)

    inputs = jax.random.normal(k_x, (N, Hin, Win, prev_C), jnp.float32)
    skip = jax.random.normal(k_skip, (N, 2 * Hin, 2 * Win, current_C), jnp.float32)

    forward = jax.jit(lambda a, b: cell(a, b))
    out = jax.block_until_ready(forward(inputs, skip))
    assert out.shape == (N, 2 * Hin, 2 * Win, current_C)
    assert bool(jnp.all(jnp.isfinite(out)))
    print("KERNEL_OK")
</pallas_src>

<mosaic_0001>
module attributes {stable_mosaic.version = 11 : i64} {
  func.func @_deconv_taps_kernel(%arg0: i32, %arg1: memref<1x8x64xf32, #tpu.memory_space<vmem>>, %arg2: memref<32x8xf32, #tpu.memory_space<vmem>>, %arg3: memref<1x32x64xf32, #tpu.memory_space<vmem>>) attributes {dimension_semantics = [#tpu.dimension_semantics<parallel>], iteration_bounds = array<i64: 2>, scalar_prefetch = 0 : i64, scratch_operands = 0 : i64, tpu.core_type = #tpu.core_type<tc>, window_params = [{transform_indices = @transform_0, window_bounds = array<i64: 1, 8, 64>}, {pipeline_mode = #tpu.pipeline_mode<synchronous>, transform_indices = @transform_1, window_bounds = array<i64: 32, 8>}, {transform_indices = @transform_2, window_bounds = array<i64: 1, 32, 64>}]} {
    %c0 = arith.constant 0 : index
    %c0_0 = arith.constant 0 : index
    %0 = vector.load %arg2[%c0, %c0_0] : memref<32x8xf32, #tpu.memory_space<vmem>>, vector<32x8xf32>
    %c0_1 = arith.constant 0 : index
    %c0_2 = arith.constant 0 : index
    %c0_3 = arith.constant 0 : index
    %1 = vector.load %arg1[%c0_1, %c0_2, %c0_3] : memref<1x8x64xf32, #tpu.memory_space<vmem>>, vector<1x8x64xf32>
    %2 = vector.shape_cast %1 : vector<1x8x64xf32> to vector<8x64xf32>
    %cst = arith.constant dense<0.000000e+00> : vector<32x64xf32>
    %3 = tpu.matmul %0, %2, %cst {dimension_numbers = #tpu.dot_dimension_numbers<[1], [0], [0], [1], [0, 0, 1, 1], [], []>} : vector<32x8xf32>, vector<8x64xf32>, vector<32x64xf32> -> vector<32x64xf32>
    %c0_4 = arith.constant 0 : index
    %c0_5 = arith.constant 0 : index
    %c0_6 = arith.constant 0 : index
    %4 = vector.load %arg3[%c0_4, %c0_5, %c0_6] : memref<1x32x64xf32, #tpu.memory_space<vmem>>, vector<1x32x64xf32>
    %5 = vector.shape_cast %4 : vector<1x32x64xf32> to vector<32x64xf32>
    %6 = vector.shape_cast %3 : vector<32x64xf32> to vector<1x32x64xf32>
    tpu.vector_store %arg3[%c0_4, %c0_5, %c0_6], %6 {strides = array<i32>} : memref<1x32x64xf32, #tpu.memory_space<vmem>>, vector<1x32x64xf32>,
    return
  }
  func.func @transform_0(%arg0: i32) -> (i32, i32, i32) {
    %c0_i32 = arith.constant 0 : i32
    %c0_i32_0 = arith.constant 0 : i32
    %c0_i32_1 = arith.constant 0 : i32
    return %arg0, %c0_i32, %c0_i32_0 : i32, i32, i32
  }
  func.func @transform_1(%arg0: i32) -> (i32, i32) {
    %c0_i32 = arith.constant 0 : i32
    %c0_i32_0 = arith.constant 0 : i32
    %c0_i32_1 = arith.constant 0 : i32
    return %c0_i32, %c0_i32_0 : i32, i32
  }
  func.func @transform_2(%arg0: i32) -> (i32, i32, i32) {
    %c0_i32 = arith.constant 0 : i32
    %c0_i32_0 = arith.constant 0 : i32
    %c0_i32_1 = arith.constant 0 : i32
    return %arg0, %c0_i32, %c0_i32_0 : i32, i32, i32
  }
}

module attributes {stable_mosaic.version = 11 : i64} {
  func.func @_dag_kernel(%arg0: i32, %arg1: memref<1x8x384xf32, #tpu.memory_space<vmem>>, %arg2: memref<1x8x384xf32, #tpu.memory_space<vmem>>, %arg3: memref<8x8xf32, #tpu.memory_space<vmem>>, %arg4: memref<8x1xf32, #tpu.memory_space<vmem>>, %arg5: memref<1x384xf32, #tpu.memory_space<vmem>>, %arg6: memref<8x72xf32, #tpu.memory_space<vmem>>, %arg7: memref<8x1xf32, #tpu.memory_space<vmem>>, %arg8: memref<8x8xf32, #tpu.memory_space<vmem>>, %arg9: memref<8x1xf32, #tpu.memory_space<vmem>>, %arg10: memref<1x8x384xf32, #tpu.memory_space<vmem>>) attributes {dimension_semantics = [#tpu.dimension_semantics<parallel>], iteration_bounds = array<i64: 2>, scalar_prefetch = 0 : i64, scratch_operands = 0 : i64, tpu.core_type = #tpu.core_type<tc>, window_params = [{transform_indices = @transform_0, window_bounds = array<i64: 1, 8, 384>}, {transform_indices = @transform_1, window_bounds = array<i64: 1, 8, 384>}, {pipeline_mode = #tpu.pipeline_mode<synchronous>, transform_indices = @transform_2, window_bounds = array<i64: 8, 8>}, {pipeline_mode = #tpu.pipeline_mode<synchronous>, transform_indices = @transform_3, window_bounds = array<i64: 8, 1>}, {pipeline_mode = #tpu.pipeline_mode<synchronous>, transform_indices = @transform_4, window_bounds = array<i64: 1, 384>}, {pipeline_mode = #tpu.pipeline_mode<synchronous>, transform_indices = @transform_5, window_bounds = array<i64: 8, 72>}, {pipeline_mode = #tpu.pipeline_mode<synchronous>, transform_indices = @transform_6, window_bounds = array<i64: 8, 1>}, {pipeline_mode = #tpu.pipeline_mode<synchronous>, transform_indices = @transform_7, window_bounds = array<i64: 8, 8>}, {pipeline_mode = #tpu.pipeline_mode<synchronous>, transform_indices = @transform_8, window_bounds = array<i64: 8, 1>}, {transform_indices = @transform_9, window_bounds = array<i64: 1, 8, 384>}]} {
    %c0 = arith.constant 0 : index
    %c0_0 = arith.constant 0 : index
    %0 = vector.load %arg5[%c0, %c0_0] : memref<1x384xf32, #tpu.memory_space<vmem>>, vector<1x384xf32>
    %c0_1 = arith.constant 0 : index
    %c0_2 = arith.constant 0 : index
    %c0_3 = arith.constant 0 : index
    %1 = vector.load %arg1[%c0_1, %c0_2, %c0_3] : memref<1x8x384xf32, #tpu.memory_space<vmem>>, vector<1x8x384xf32>
    %2 = vector.shape_cast %1 : vector<1x8x384xf32> to vector<8x384xf32>
    %c0_4 = arith.constant 0 : index
    %c0_5 = arith.constant 0 : index
    %c0_6 = arith.constant 0 : index
    %3 = vector.load %arg2[%c0_4, %c0_5, %c0_6] : memref<1x8x384xf32, #tpu.memory_space<vmem>>, vector<1x8x384xf32>
    %4 = vector.shape_cast %3 : vector<1x8x384xf32> to vector<8x384xf32>
    %c0_7 = arith.constant 0 : index
    %c0_8 = arith.constant 0 : index
    %5 = vector.load %arg3[%c0_7, %c0_8] : memref<8x8xf32, #tpu.memory_space<vmem>>, vector<8x8xf32>
    %cst = arith.constant dense<0.000000e+00> : vector<8x384xf32>
    %6 = tpu.matmul %5, %4, %cst {dimension_numbers = #tpu.dot_dimension_numbers<[1], [0], [0], [1], [0, 0, 1, 1], [], []>} : vector<8x8xf32>, vector<8x384xf32>, vector<8x384xf32> -> vector<8x384xf32>
    %7 = arith.addf %2, %6 : vector<8x384xf32>
    %c0_9 = arith.constant 0 : index
    %c0_10 = arith.constant 0 : index
    %8 = vector.load %arg4[%c0_9, %c0_10] : memref<8x1xf32, #tpu.memory_space<vmem>>, vector<8x1xf32>
    %9 = vector.broadcast %8 : vector<8x1xf32> to vector<8x384xf32>
    %10 = arith.addf %7, %9 : vector<8x384xf32>
    %11 = vector.broadcast %0 : vector<1x384xf32> to vector<8x384xf32>
    %12 = arith.mulf %10, %11 : vector<8x384xf32>
    %c0_11 = arith.constant 0 : index
    %c0_12 = arith.constant 0 : index
    %13 = vector.load %arg6[%c0_11, %c0_12] : memref<8x72xf32, #tpu.memory_space<vmem>>, vector<8x72xf32>
    %c0_13 = arith.constant 0 : index
    %c0_14 = arith.constant 0 : index
    %14 = vector.load %arg7[%c0_13, %c0_14] : memref<8x1xf32, #tpu.memory_space<vmem>>, vector<8x1xf32>
    %c19_i32 = arith.constant 19 : i32
    %15 = tpu.dynamic_rotate %12 by %c19_i32 dim 1 : vector<8x384xf32>, i32 -> vector<8x384xf32>
    %c18_i32 = arith.constant 18 : i32
    %16 = tpu.dynamic_rotate %12 by %c18_i32 dim 1 : vector<8x384xf32>, i32 -> vector<8x384xf32>
    %c17_i32 = arith.constant 17 : i32
    %17 = tpu.dynamic_rotate %12 by %c17_i32 dim 1 : vector<8x384xf32>, i32 -> vector<8x384xf32>
    %c1_i32 = arith.constant 1 : i32
    %18 = tpu.dynamic_rotate %12 by %c1_i32 dim 1 : vector<8x384xf32>, i32 -> vector<8x384xf32>
    %c383_i32 = arith.constant 383 : i32
    %19 = tpu.dynamic_rotate %12 by %c383_i32 dim 1 : vector<8x384xf32>, i32 -> vector<8x384xf32>
    %c367_i32 = arith.constant 367 : i32
    %20 = tpu.dynamic_rotate %12 by %c367_i32 dim 1 : vector<8x384xf32>, i32 -> vector<8x384xf32>
    %c366_i32 = arith.constant 366 : i32
    %21 = tpu.dynamic_rotate %12 by %c366_i32 dim 1 : vector<8x384xf32>, i32 -> vector<8x384xf32>
    %c365_i32 = arith.constant 365 : i32
    %22 = tpu.dynamic_rotate %12 by %c365_i32 dim 1 : vector<8x384xf32>, i32 -> vector<8x384xf32>
    %23 = tpu.concatenate %15, %16, %17, %18, %12, %19, %20, %21, %22 in 0 : vector<8x384xf32>, vector<8x384xf32>, vector<8x384xf32>, vector<8x384xf32>, vector<8x384xf32>, vector<8x384xf32>, vector<8x384xf32>, vector<8x384xf32>, vector<8x384xf32> -> vector<72x384xf32>
    %cst_15 = arith.constant dense<0.000000e+00> : vector<8x384xf32>
    %24 = tpu.matmul %13, %23, %cst_15 {dimension_numbers = #tpu.dot_dimension_numbers<[1], [0], [0], [1], [0, 0, 1, 1], [], []>} : vector<8x72xf32>, vector<72x384xf32>, vector<8x384xf32> -> vector<8x384xf32>
    %25 = vector.broadcast %14 : vector<8x1xf32> to vector<8x384xf32>
    %26 = arith.addf %24, %25 : vector<8x384xf32>
    %cst_16 = arith.constant 0.000000e+00 : f32
    %27 = vector.broadcast %cst_16 : f32 to vector<8x384xf32>
    %28 = arith.maximumf %26, %27 : vector<8x384xf32>
    %29 = vector.broadcast %0 : vector<1x384xf32> to vector<8x384xf32>
    %30 = arith.mulf %28, %29 : vector<8x384xf32>
    %31 = arith.addf %12, %30 : vector<8x384xf32>
    %32 = arith.addf %30, %31 : vector<8x384xf32>
    %c0_17 = arith.constant 0 : index
    %c0_18 = arith.constant 0 : index
    %33 = vector.load %arg8[%c0_17, %c0_18] : memref<8x8xf32, #tpu.memory_space<vmem>>, vector<8x8xf32>
    %c0_19 = arith.constant 0 : index
    %c0_20 = arith.constant 0 : index
    %34 = vector.load %arg9[%c0_19, %c0_20] : memref<8x1xf32, #tpu.memory_space<vmem>>, vector<8x1xf32>
    %cst_21 = arith.constant dense<0.000000e+00> : vector<8x384xf32>
    %35 = tpu.matmul %33, %32, %cst_21 {dimension_numbers = #tpu.dot_dimension_numbers<[1], [0], [0], [1], [0, 0, 1, 1], [], []>} : vector<8x8xf32>, vector<8x384xf32>, vector<8x384xf32> -> vector<8x384xf32>
    %36 = vector.broadcast %34 : vector<8x1xf32> to vector<8x384xf32>
    %37 = arith.addf %35, %36 : vector<8x384xf32>
    %cst_22 = arith.constant 0.000000e+00 : f32
    %38 = vector.broadcast %cst_22 : f32 to vector<8x384xf32>
    %39 = arith.maximumf %37, %38 : vector<8x384xf32>
    %40 = vector.broadcast %0 : vector<1x384xf32> to vector<8x384xf32>
    %41 = arith.mulf %39, %40 : vector<8x384xf32>
    %42 = arith.addf %31, %41 : vector<8x384xf32>
    %c0_23 = arith.constant 0 : index
    %c0_24 = arith.constant 0 : index
    %c0_25 = arith.constant 0 : index
    %43 = vector.load %arg10[%c0_23, %c0_24, %c0_25] : memref<1x8x384xf32, #tpu.memory_space<vmem>>, vector<1x8x384xf32>
    %44 = vector.shape_cast %43 : vector<1x8x384xf32> to vector<8x384xf32>
    %45 = vector.shape_cast %42 : vector<8x384xf32> to vector<1x8x384xf32>
    tpu.vector_store %arg10[%c0_23, %c0_24, %c0_25], %45 {strides = array<i32>} : memref<1x8x384xf32, #tpu.memory_space<vmem>>, vector<1x8x384xf32>,
    return
  }
  func.func @transform_0(%arg0: i32) -> (i32, i32, i32) {
    %c0_i32 = arith.constant 0 : i32
    %c0_i32_0 = arith.constant 0 : i32
    %c0_i32_1 = arith.constant 0 : i32
    return %arg0, %c0_i32, %c0_i32_0 : i32, i32, i32
  }
  func.func @transform_1(%arg0: i32) -> (i32, i32, i32) {
    %c0_i32 = arith.constant 0 : i32
    %c0_i32_0 = arith.constant 0 : i32
    %c0_i32_1 = arith.constant 0 : i32
    return %arg0, %c0_i32, %c0_i32_0 : i32, i32, i32
  }
  func.func @transform_2(%arg0: i32) -> (i32, i32) {
    %c0_i32 = arith.constant 0 : i32
    %c0_i32_0 = arith.constant 0 : i32
    %c0_i32_1 = arith.constant 0 : i32
    return %c0_i32, %c0_i32_0 : i32, i32
  }
  func.func @transform_3(%arg0: i32) -> (i32, i32) {
    %c0_i32 = arith.constant 0 : i32
    %c0_i32_0 = arith.constant 0 : i32
    %c0_i32_1 = arith.constant 0 : i32
    return %c0_i32, %c0_i32_0 : i32, i32
  }
  func.func @transform_4(%arg0: i32) -> (i32, i32) {
    %c0_i32 = arith.constant 0 : i32
    %c0_i32_0 = arith.constant 0 : i32
    %c0_i32_1 = arith.constant 0 : i32
    return %c0_i32, %c0_i32_0 : i32, i32
  }
  func.func @transform_5(%arg0: i32) -> (i32, i32) {
    %c0_i32 = arith.constant 0 : i32
    %c0_i32_0 = arith.constant 0 : i32
    %c0_i32_1 = arith.constant 0 : i32
    return %c0_i32, %c0_i32_0 : i32, i32
  }
  func.func @transform_6(%arg0: i32) -> (i32, i32) {
    %c0_i32 = arith.constant 0 : i32
    %c0_i32_0 = arith.constant 0 : i32
    %c0_i32_1 = arith.constant 0 : i32
    return %c0_i32, %c0_i32_0 : i32, i32
  }
  func.func @transform_7(%arg0: i32) -> (i32, i32) {
    %c0_i32 = arith.constant 0 : i32
    %c0_i32_0 = arith.constant 0 : i32
    %c0_i32_1 = arith.constant 0 : i32
    return %c0_i32, %c0_i32_0 : i32, i32
  }
  func.func @transform_8(%arg0: i32) -> (i32, i32) {
    %c0_i32 = arith.constant 0 : i32
    %c0_i32_0 = arith.constant 0 : i32
    %c0_i32_1 = arith.constant 0 : i32
    return %c0_i32, %c0_i32_0 : i32, i32
  }
  func.func @transform_9(%arg0: i32) -> (i32, i32, i32) {
    %c0_i32 = arith.constant 0 : i32
    %c0_i32_0 = arith.constant 0 : i32
    %c0_i32_1 = arith.constant 0 : i32
    return %arg0, %c0_i32, %c0_i32_0 : i32, i32, i32
  }
}

</mosaic_0001>

<llo_original>
// kernel: _lambda_.2
$region0: #{_lambda_.2}
  #allocation0 [shape = 'u32[]', space=smem, size = 0x4, offset = 0x4, fixed_abs, tag = 'smem constant byte address 0x4 - core index']
  #allocation1 [shape = 'u32[144,128]{1,0:T(1,128)}', space=vmem, size = 0x12000, scoped, tag = 'internal scratch']
  %s0 = inlined_call_operand.vmem [shape: f32[2,8,64], index: 0, kind: input, shape index: {}]
  %s1 = inlined_call_operand.vmem [shape: f32[32,8], index: 1, kind: input, shape index: {}]
  %s2 = inlined_call_operand.vmem [shape: f32[2,32,64], index: 2, kind: output, shape index: {}]
  %s3 = sld [smem:[#allocation0]]
  $region41: #{_lambda_.2} parent=0
    _
  %s5 = ssub.s32 1, %s3
  %s6 = scalar_select 0, %s5, %s3
  loop: start=0, step=1, limit=4
  $region2: #{_lambda_.2} parent=0 // loop_pre_header
    _
  $region3: #{_lambda_.2} parent=0 // loop_header
    %s8 = sphi 0, %s12
    %p9 = scmp.ge.s32.totalorder %s8, 4
    %s18 = sphi 0, %s20
    %s21 = sphi 0, %s18
    %s22 = sphi 0, %s21
    %s38 = sphi 0, %s22
    %s42 = sphi 0, %s42
    %s44 = sphi 0, %s42
    %s45 = sphi 0, %s44
    %s59 = sphi 0, %s45
    %s65 = sphi 0, %s67
    %s68 = sphi 0, %s65
    %s69 = sphi 0, %s68
    %s85 = sphi 0, %s69
  $region4: #{_lambda_.2} parent=0 // loop_header_branch
    %11 = sbr.rel (%p9) target = $region8
  $region5: #{_lambda_.2} parent=0 // loop_body
    %s13 = ssub.s32 %s8, 1
    %s14 = ssub.s32 %s8, 2
    %s15 = sadd.s32 %s8, 1
    %s16 = ssub.s32 %s8, %s15
    %p17 = scmp.eq.s32.totalorder %s16, 0
    %s19 = sadd.s32 %s18, 1
    %s20 = scalar_select %p17, %s18, %s19
    %p23 = pneg %p17
    %p24 = scmp.eq.s32.totalorder %s8, 1
    %p25 = por %p23, %p24
    %p26 = scmp.ne.s32.totalorder %s18, %s21
    %p27 = scmp.eq.s32.totalorder %s8, 0
    %p28 = por %p26, %p27
    %p29 = scmp.ne.s32.totalorder %s18, %s21
    %p30 = scmp.eq.s32.totalorder %s13, 1
    %p31 = por %p29, %p30
    %p32 = scmp.ne.s32.totalorder %s21, %s22
    %p33 = scmp.eq.s32.totalorder %s13, 0
    %p34 = por %p32, %p33
    %p35 = scmp.ne.s32.totalorder %s21, %s22
    %p36 = scmp.eq.s32.totalorder %s14, 1
    %p37 = por %p35, %p36
    %p39 = scmp.ne.s32.totalorder %s22, %s38
    %p40 = scmp.eq.s32.totalorder %s14, 0
    %p41 = por %p39, %p40
    %s43 = sadd.s32 %s42, 1
    %p46 = scmp.eq.s32.totalorder %s8, 1
    %p47 = scmp.ne.s32.totalorder %s42, %s44
    %p48 = scmp.eq.s32.totalorder %s8, 0
    %p49 = por %p47, %p48
    %p50 = scmp.ne.s32.totalorder %s42, %s44
    %p51 = scmp.eq.s32.totalorder %s13, 1
    %p52 = por %p50, %p51
    %p53 = scmp.ne.s32.totalorder %s44, %s45
    %p54 = scmp.eq.s32.totalorder %s13, 0
    %p55 = por %p53, %p54
    %p56 = scmp.ne.s32.totalorder %s44, %s45
    %p57 = scmp.eq.s32.totalorder %s14, 1
    %p58 = por %p56, %p57
    %p60 = scmp.ne.s32.totalorder %s45, %s59
    %p61 = scmp.eq.s32.totalorder %s14, 0
    %p62 = por %p60, %p61
    %s63 = ssub.s32 %s8, %s15
    %p64 = scmp.eq.s32.totalorder %s63, 0
    %s66 = sadd.s32 %s65, 1
    %s67 = scalar_select %p64, %s65, %s66
    %p70 = pneg %p64
    %p71 = scmp.eq.s32.totalorder %s8, 1
    %p72 = por %p70, %p71
    %p73 = scmp.ne.s32.totalorder %s65, %s68
    %p74 = scmp.eq.s32.totalorder %s8, 0
    %p75 = por %p73, %p74
    %p76 = scmp.ne.s32.totalorder %s65, %s68
    %p77 = scmp.eq.s32.totalorder %s13, 1
    %p78 = por %p76, %p77
    %p79 = scmp.ne.s32.totalorder %s68, %s69
    %p80 = scmp.eq.s32.totalorder %s13, 0
    %p81 = por %p79, %p80
    %p82 = scmp.ne.s32.totalorder %s68, %s69
    %p83 = scmp.eq.s32.totalorder %s14, 1
    %p84 = por %p82, %p83
    %p86 = scmp.ne.s32.totalorder %s69, %s85
    %p87 = scmp.eq.s32.totalorder %s14, 0
    %p88 = por %p86, %p87
    %p89 = scmp.le.s32.totalorder 1, %s8
    %p90 = scmp.lt.s32.totalorder %s8, 3
    %p91 = pnand %p89, %p90
    %p92 = pneg %p91
    // Predicated region
    $region9: #{_lambda_.2} parent=5 // pred_check
      _
    $region10: #{_lambda_.2} parent=5 // pred_check_branch
      %94 = sbr.rel (%p91) target = $region12
    $region11: #{_lambda_.2} parent=5 // pred_region
      %s95 = ssub.s32 %s8, 1
      // Predicated region
      $region13: #{_lambda_.2} parent=11 // pred_check
        %p96 = pneg %p55
      $region14: #{_lambda_.2} parent=11 // pred_check_branch
        %98 = sbr.rel (%p96) target = $region16
      $region15: #{_lambda_.2} parent=11 // pred_region
        _
      $region16: #{_lambda_.2} parent=11 // pred_fallthru
        _
    $region12: #{_lambda_.2} parent=5 // pred_fallthru
      _
    %p99 = scmp.lt.s32.totalorder %s8, 2
    // Predicated region
    $region17: #{_lambda_.2} parent=5 // pred_check
      %p100 = pneg %p99
    $region18: #{_lambda_.2} parent=5 // pred_check_branch
      %102 = sbr.rel (%p100) target = $region20
    $region19: #{_lambda_.2} parent=5 // pred_region
      // Predicated region
      $region21: #{_lambda_.2} parent=19 // pred_check
        %p103 = pneg %p28
      $region22: #{_lambda_.2} parent=19 // pred_check_branch
        %105 = sbr.rel (%p103) target = $region24
      $region23: #{_lambda_.2} parent=19 // pred_region
        %p106 = scmp.lt.s32.totalorder %s8, 1
        %s107 = scalar_select %p106, %s8, 1
        %s108 = smul.addr %s107, 8
        %s109 = scalar_lea.vmem %s0, %s108
      $region24: #{_lambda_.2} parent=19 // pred_fallthru
        _
    $region20: #{_lambda_.2} parent=5 // pred_fallthru
      _
    %p110 = scmp.le.s32.totalorder 1, %s8
    %p111 = scmp.lt.s32.totalorder %s8, 3
    %p112 = pnand %p110, %p111
    %p113 = pneg %p112
    // Predicated region
    $region25: #{_lambda_.2} parent=5 // pred_check
      _
    $region26: #{_lambda_.2} parent=5 // pred_check_branch
      %115 = sbr.rel (%p112) target = $region28
    $region27: #{_lambda_.2} parent=5 // pred_region
      %s116 = ssub.s32 %s8, 1
      %p117 = scmp.lt.s32.totalorder %s13, 1
      %s118 = scalar_select %p117, %s13, 1
      %s119 = smul.addr %s118, 8
      %s120 = scalar_lea.vmem %s0, %s119
      %p121 = pneg %p34
      %p122 = pneg %p31
      %p123 = pneg %p55
      %p124 = pneg %p52
      %p125 = pneg %p81
      %p126 = pneg %p78
      %p127 = scmp.lt.s32.totalorder %s13, 1
      %s128 = scalar_select %p127, %s13, 1
      %s129 = smul.addr %s128, 4
      %s130 = smul.addr %s129, 8
      %s131 = scalar_lea.vmem %s2, %s130
      %p132 = scmp.lt.s32.totalorder %s13, 1
      %s133 = scalar_select %p132, %s13, 1
      %s134 = smul.addr %s133, 8
      %s135 = scalar_lea.vmem %s0, %s134
      %p136 = scmp.lt.s32.totalorder %s13, 1
      %s137 = scalar_select %p136, %s13, 1
      %s138 = smul.addr %s137, 4
      %s139 = smul.addr %s138, 8
      %s140 = scalar_lea.vmem %s2, %s139
      %v141 = vld [vmem:[%s1] sm:$0xff]
      %v142 = vld [vmem:[%s1 + $0x8] sm:$0xff]
      %v143 = vld [vmem:[%s1 + $0x10] sm:$0xff]
      %v144 = vld [vmem:[%s1 + $0x18] sm:$0xff]
      %v145 = vld [vmem:[%s135] sm:$0xff]
      %vm146 = vcmask 64512
      %v148 = vsel %vm146, %v141, 0
      %v151 = vsel %vm146, %v142, 0
      %v154 = vsel %vm146, %v143, 0
      %v157 = vsel %vm146, %v144, 0
      %159 = vmatprep.subr.mxu0 0.0
      %160 = vmatpush1.msra.mxu0 %v145
      %161 = vmatprep.subr.mxu0 0.0
      %162 = vmatpush1.msra.mxu0 0.0
      %163 = vmatprep.subr.mxu0 0.0
      %164 = vmatpush1.msra.mxu0 0.0
      %165 = vmatprep.subr.mxu0 0.0
      %166 = vmatpush1.msra.mxu0 0.0
      %167 = vmatprep.subr.mxu0 0.0
      %168 = vmatpush1.msra.mxu0 0.0
      %169 = vmatprep.subr.mxu0 0.0
      %170 = vmatpush1.msra.mxu0 0.0
      %171 = vmatprep.subr.mxu0 0.0
      %172 = vmatpush1.msra.mxu0 0.0
      %173 = vmatprep.subr.mxu0 0.0
      %174 = vmatpush1.msra.mxu0 0.0
      %175 = vmatprep.subr.mxu0 0.0
      %176 = vmatpush1.msra.mxu0 0.0
      %177 = vmatprep.subr.mxu0 0.0
      %178 = vmatpush1.msra.mxu0 0.0
      %179 = vmatprep.subr.mxu0 0.0
      %180 = vmatpush1.msra.mxu0 0.0
      %181 = vmatprep.subr.mxu0 0.0
      %182 = vmatpush1.msra.mxu0 0.0
      %183 = vmatprep.subr.mxu0 0.0
      %184 = vmatpush1.msra.mxu0 0.0
      %185 = vmatprep.subr.mxu0 0.0
      %186 = vmatpush1.msra.mxu0 0.0
      %187 = vmatprep.subr.mxu0 0.0
      %188 = vmatpush1.msra.mxu0 0.0
      %189 = vmatprep.subr.mxu0 0.0
      %190 = vmatpush1.msra.mxu0 0.0
      %191 = vmatprep.subr.mxu0 0.0
      %192 = vmatpush1.msra.mxu0 0.0
      %193 = vmatprep.subr.mxu0 0.0
      %194 = vmatpush1.msra.mxu0 0.0
      %195 = vmatprep.subr.mxu0 0.0
      %196 = vmatpush1.msra.mxu0 0.0
      %197 = vmatprep.subr.mxu0 0.0
      %198 = vmatpush1.msra.mxu0 0.0
      %199 = vmatprep.subr.mxu0 0.0
      %200 = vmatpush1.msra.mxu0 0.0
      %201 = vmatprep.subr.mxu0 0.0
      %202 = vmatpush1.msra.mxu0 0.0
      %203 = vmatprep.subr.mxu0 0.0
      %204 = vmatpush1.msra.mxu0 0.0
      %205 = vmatprep.subr.mxu0 0.0
      %206 = vmatpush1.msra.mxu0 0.0
      %207 = vmatprep.subr.mxu0 0.0
      %208 = vmatpush1.msra.mxu0 0.0
      %209 = vmatprep.subr.mxu0 0.0
      %210 = vmatpush1.msra.mxu0 0.0
      %211 = vmatprep.subr.mxu0 0.0
      %212 = vmatpush1.msra.mxu0 0.0
      %213 = vmatprep.subr.mxu0 0.0
      %214 = vmatpush1.msra.mxu0 0.0
      %215 = vmatprep.subr.mxu0 0.0
      %216 = vmatpush1.msra.mxu0 0.0
      %217 = vmatprep.subr.mxu0 0.0
      %218 = vmatpush1.msra.mxu0 0.0
      %219 = vmatprep.subr.mxu0 0.0
      %220 = vmatpush1.msra.mxu0 0.0
      %221 = vmatprep.subr.mxu0 0.0
      %222 = vmatpush1.msra.mxu0 0.0
      %223 = vmatprep.mubr.f32.mxu0 0.0
      %224 = vmatmul.mubr.f32.gmra.mrb[0].mxu0 %v148
      %v225 = vpop.f32.mrb[0].mxu0
      %v226 = vadd.f32 0.0, %v225
      %v227 = vpop.f32.mrb[0].mxu0
      %228 = vmatprep.mubr.f32.mxu0 0.0
      %229 = vmatmul.mubr.f32.gmra.mrb[0].mxu0 %v151
      %v230 = vpop.f32.mrb[0].mxu0
      %v231 = vadd.f32 0.0, %v230
      %v232 = vpop.f32.mrb[0].mxu0
      %233 = vmatprep.mubr.f32.mxu0 0.0
      %234 = vmatmul.mubr.f32.gmra.mrb[0].mxu0 %v154
      %v235 = vpop.f32.mrb[0].mxu0
      %v236 = vadd.f32 0.0, %v235
      %v237 = vpop.f32.mrb[0].mxu0
      %238 = vmatprep.mubr.f32.mxu0 0.0
      %239 = vmatmul.mubr.f32.gmra.mrb[0].mxu0 %v157
      %v240 = vpop.f32.mrb[0].mxu0
      %v241 = vadd.f32 0.0, %v240
      %v242 = vpop.f32.mrb[0].mxu0
      %243 = vdwg.mxu0
      %vm244 = vcmask 523264
      %245 = vst.msk [vmem:[%s140] sm:$0xff] %vm244, %v226
      %246 = vst.msk [vmem:[%s140 + $0x8] sm:$0xff] %vm244, %v231
      %247 = vst.msk [vmem:[%s140 + $0x10] sm:$0xff] %vm244, %v236
      %248 = vst.msk [vmem:[%s140 + $0x18] sm:$0xff] %vm244, %v241
      %p249 = scmp.lt.s32.totalorder %s13, 1
      %s250 = scalar_select %p249, %s13, 1
      %s251 = smul.addr %s250, 4
      %s252 = smul.addr %s251, 8
      %s253 = scalar_lea.vmem %s2, %s252
      // Predicated region
      $region29: #{_lambda_.2} parent=27 // pred_check
        %p254 = pneg %p78
      $region30: #{_lambda_.2} parent=27 // pred_check_branch
        %256 = sbr.rel (%p254) target = $region32
      $region31: #{_lambda_.2} parent=27 // pred_region
        _
      $region32: #{_lambda_.2} parent=27 // pred_fallthru
        _
    $region28: #{_lambda_.2} parent=5 // pred_fallthru
      _
    %p257 = scmp.le.s32.totalorder 2, %s8
    // Predicated region
    $region33: #{_lambda_.2} parent=5 // pred_check
      %p258 = pneg %p257
    $region34: #{_lambda_.2} parent=5 // pred_check_branch
      %260 = sbr.rel (%p258) target = $region36
    $region35: #{_lambda_.2} parent=5 // pred_region
      %s261 = ssub.s32 %s8, 2
      // Predicated region
      $region37: #{_lambda_.2} parent=35 // pred_check
        %p262 = pneg %p84
      $region38: #{_lambda_.2} parent=35 // pred_check_branch
        %264 = sbr.rel (%p262) target = $region40
      $region39: #{_lambda_.2} parent=35 // pred_region
        %p265 = scmp.lt.s32.totalorder %s14, 1
        %s266 = scalar_select %p265, %s14, 1
        %s267 = smul.addr %s266, 4
        %s268 = smul.addr %s267, 8
        %s269 = scalar_lea.vmem %s2, %s268
      $region40: #{_lambda_.2} parent=35 // pred_fallthru
        _
    $region36: #{_lambda_.2} parent=5 // pred_fallthru
      _
  $region6: #{_lambda_.2} parent=0 // loop_footer
    %s12 = sadd.s32 1, %s8
  $region7: #{_lambda_.2} parent=0 // loop_footer_branch
    %7 = sbr.rel target = $region3
  $region8: #{_lambda_.2} parent=0 // loop_exit
    _

// kernel: _lambda_.3
$region0: #{_lambda_.3}
  #allocation0 [shape = 'u32[]', space=smem, size = 0x4, offset = 0x4, fixed_abs, tag = 'smem constant byte address 0x4 - core index']
  #allocation1 [shape = 'u32[144,128]{1,0:T(1,128)}', space=vmem, size = 0x12000, scoped, tag = 'internal scratch']
  %s0 = inlined_call_operand.vmem [shape: f32[2,8,384], index: 0, kind: input, shape index: {}]
  %s1 = inlined_call_operand.vmem [shape: f32[2,8,384], index: 1, kind: input, shape index: {}]
  %s2 = inlined_call_operand.vmem [shape: f32[8,8], index: 2, kind: input, shape index: {}]
  %s3 = inlined_call_operand.vmem [shape: f32[8,1], index: 3, kind: input, shape index: {}]
  %s4 = inlined_call_operand.vmem [shape: f32[1,384], index: 4, kind: input, shape index: {}]
  %s5 = inlined_call_operand.vmem [shape: f32[8,72], index: 5, kind: input, shape index: {}]
  %s6 = inlined_call_operand.vmem [shape: f32[8,1], index: 6, kind: input, shape index: {}]
  %s7 = inlined_call_operand.vmem [shape: f32[8,8], index: 7, kind: input, shape index: {}]
  %s8 = inlined_call_operand.vmem [shape: f32[8,1], index: 8, kind: input, shape index: {}]
  %s9 = inlined_call_operand.vmem [shape: f32[2,8,384], index: 9, kind: output, shape index: {}]
  %s10 = sld [smem:[#allocation0]]
  $region69: #{_lambda_.3} parent=0
    _
  %s12 = ssub.s32 1, %s10
  %s13 = scalar_select 0, %s12, %s10
  loop: start=0, step=1, limit=4
  $region2: #{_lambda_.3} parent=0 // loop_pre_header
    _
  $region3: #{_lambda_.3} parent=0 // loop_header
    %s15 = sphi 0, %s19
    %p16 = scmp.ge.s32.totalorder %s15, 4
    %s25 = sphi 0, %s27
    %s28 = sphi 0, %s25
    %s29 = sphi 0, %s28
    %s45 = sphi 0, %s29
    %s51 = sphi 0, %s53
    %s54 = sphi 0, %s51
    %s55 = sphi 0, %s54
    %s71 = sphi 0, %s55
    %s75 = sphi 0, %s75
    %s77 = sphi 0, %s75
    %s78 = sphi 0, %s77
    %s92 = sphi 0, %s78
    %s96 = sphi 0, %s96
    %s98 = sphi 0, %s96
    %s99 = sphi 0, %s98
    %s113 = sphi 0, %s99
    %s117 = sphi 0, %s117
    %s119 = sphi 0, %s117
    %s120 = sphi 0, %s119
    %s134 = sphi 0, %s120
    %s138 = sphi 0, %s138
    %s140 = sphi 0, %s138
    %s141 = sphi 0, %s140
    %s155 = sphi 0, %s141
    %s159 = sphi 0, %s159
    %s161 = sphi 0, %s159
    %s162 = sphi 0, %s161
    %s176 = sphi 0, %s162
    %s180 = sphi 0, %s180
    %s182 = sphi 0, %s180
    %s183 = sphi 0, %s182
    %s197 = sphi 0, %s183
    %s201 = sphi 0, %s201
    %s203 = sphi 0, %s201
    %s204 = sphi 0, %s203
    %s218 = sphi 0, %s204
    %s224 = sphi 0, %s226
    %s227 = sphi 0, %s224
    %s228 = sphi 0, %s227
    %s244 = sphi 0, %s228
  $region4: #{_lambda_.3} parent=0 // loop_header_branch
    %18 = sbr.rel (%p16) target = $region8
  $region5: #{_lambda_.3} parent=0 // loop_body
    %s20 = ssub.s32 %s15, 1
    %s21 = ssub.s32 %s15, 2
    %s22 = sadd.s32 %s15, 1
    %s23 = ssub.s32 %s15, %s22
    %p24 = scmp.eq.s32.totalorder %s23, 0
    %s26 = sadd.s32 %s25, 1
    %s27 = scalar_select %p24, %s25, %s26
    %p30 = pneg %p24
    %p31 = scmp.eq.s32.totalorder %s15, 1
    %p32 = por %p30, %p31
    %p33 = scmp.ne.s32.totalorder %s25, %s28
    %p34 = scmp.eq.s32.totalorder %s15, 0
    %p35 = por %p33, %p34
    %p36 = scmp.ne.s32.totalorder %s25, %s28
    %p37 = scmp.eq.s32.totalorder %s20, 1
    %p38 = por %p36, %p37
    %p39 = scmp.ne.s32.totalorder %s28, %s29
    %p40 = scmp.eq.s32.totalorder %s20, 0
    %p41 = por %p39, %p40
    %p42 = scmp.ne.s32.totalorder %s28, %s29
    %p43 = scmp.eq.s32.totalorder %s21, 1
    %p44 = por %p42, %p43
    %p46 = scmp.ne.s32.totalorder %s29, %s45
    %p47 = scmp.eq.s32.totalorder %s21, 0
    %p48 = por %p46, %p47
    %s49 = ssub.s32 %s15, %s22
    %p50 = scmp.eq.s32.totalorder %s49, 0
    %s52 = sadd.s32 %s51, 1
    %s53 = scalar_select %p50, %s51, %s52
    %p56 = pneg %p50
    %p57 = scmp.eq.s32.totalorder %s15, 1
    %p58 = por %p56, %p57
    %p59 = scmp.ne.s32.totalorder %s51, %s54
    %p60 = scmp.eq.s32.totalorder %s15, 0
    %p61 = por %p59, %p60
    %p62 = scmp.ne.s32.totalorder %s51, %s54
    %p63 = scmp.eq.s32.totalorder %s20, 1
    %p64 = por %p62, %p63
    %p65 = scmp.ne.s32.totalorder %s54, %s55
    %p66 = scmp.eq.s32.totalorder %s20, 0
    %p67 = por %p65, %p66
    %p68 = scmp.ne.s32.totalorder %s54, %s55
    %p69 = scmp.eq.s32.totalorder %s21, 1
    %p70 = por %p68, %p69
    %p72 = scmp.ne.s32.totalorder %s55, %s71
    %p73 = scmp.eq.s32.totalorder %s21, 0
    %p74 = por %p72, %p73
    %s76 = sadd.s32 %s75, 1
    %p79 = scmp.eq.s32.totalorder %s15, 1
    %p80 = scmp.ne.s32.totalorder %s75, %s77
    %p81 = scmp.eq.s32.totalorder %s15, 0
    %p82 = por %p80, %p81
    %p83 = scmp.ne.s32.totalorder %s75, %s77
    %p84 = scmp.eq.s32.totalorder %s20, 1
    %p85 = por %p83, %p84
    %p86 = scmp.ne.s32.totalorder %s77, %s78
    %p87 = scmp.eq.s32.totalorder %s20, 0
    %p88 = por %p86, %p87
    %p89 = scmp.ne.s32.totalorder %s77, %s78
    %p90 = scmp.eq.s32.totalorder %s21, 1
    %p91 = por %p89, %p90
    %p93 = scmp.ne.s32.totalorder %s78, %s92
    %p94 = scmp.eq.s32.totalorder %s21, 0
    %p95 = por %p93, %p94
    %s97 = sadd.s32 %s96, 1
    %p100 = scmp.eq.s32.totalorder %s15, 1
    %p101 = scmp.ne.s32.totalorder %s96, %s98
    %p102 = scmp.eq.s32.totalorder %s15, 0
    %p103 = por %p101, %p102
    %p104 = scmp.ne.s32.totalorder %s96, %s98
    %p105 = scmp.eq.s32.totalorder %s20, 1
    %p106 = por %p104, %p105
    %p107 = scmp.ne.s32.totalorder %s98, %s99
    %p108 = scmp.eq.s32.totalorder %s20, 0
    %p109 = por %p107, %p108
    %p110 = scmp.ne.s32.totalorder %s98, %s99
    %p111 = scmp.eq.s32.totalorder %s21, 1
    %p112 = por %p110, %p111
    %p114 = scmp.ne.s32.totalorder %s99, %s113
    %p115 = scmp.eq.s32.totalorder %s21, 0
    %p116 = por %p114, %p115
    %s118 = sadd.s32 %s117, 1
    %p121 = scmp.eq.s32.totalorder %s15, 1
    %p122 = scmp.ne.s32.totalorder %s117, %s119
    %p123 = scmp.eq.s32.totalorder %s15, 0
    %p124 = por %p122, %p123
    %p125 = scmp.ne.s32.totalorder %s117, %s119
    %p126 = scmp.eq.s32.totalorder %s20, 1
    %p127 = por %p125, %p126
    %p128 = scmp.ne.s32.totalorder %s119, %s120
    %p129 = scmp.eq.s32.totalorder %s20, 0
    %p130 = por %p128, %p129
    %p131 = scmp.ne.s32.totalorder %s119, %s120
    %p132 = scmp.eq.s32.totalorder %s21, 1
    %p133 = por %p131, %p132
    %p135 = scmp.ne.s32.totalorder %s120, %s134
    %p136 = scmp.eq.s32.totalorder %s21, 0
    %p137 = por %p135, %p136
    %s139 = sadd.s32 %s138, 1
    %p142 = scmp.eq.s32.totalorder %s15, 1
    %p143 = scmp.ne.s32.totalorder %s138, %s140
    %p144 = scmp.eq.s32.totalorder %s15, 0
    %p145 = por %p143, %p144
    %p146 = scmp.ne.s32.totalorder %s138, %s140
    %p147 = scmp.eq.s32.totalorder %s20, 1
    %p148 = por %p146, %p147
    %p149 = scmp.ne.s32.totalorder %s140, %s141
    %p150 = scmp.eq.s32.totalorder %s20, 0
    %p151 = por %p149, %p150
    %p152 = scmp.ne.s32.totalorder %s140, %s141
    %p153 = scmp.eq.s32.totalorder %s21, 1
    %p154 = por %p152, %p153
    %p156 = scmp.ne.s32.totalorder %s141, %s155
    %p157 = scmp.eq.s32.totalorder %s21, 0
    %p158 = por %p156, %p157
    %s160 = sadd.s32 %s159, 1
    %p163 = scmp.eq.s32.totalorder %s15, 1
    %p164 = scmp.ne.s32.totalorder %s159, %s161
    %p165 = scmp.eq.s32.totalorder %s15, 0
    %p166 = por %p164, %p165
    %p167 = scmp.ne.s32.totalorder %s159, %s161
    %p168 = scmp.eq.s32.totalorder %s20, 1
    %p169 = por %p167, %p168
    %p170 = scmp.ne.s32.totalorder %s161, %s162
    %p171 = scmp.eq.s32.totalorder %s20, 0
    %p172 = por %p170, %p171
    %p173 = scmp.ne.s32.totalorder %s161, %s162
    %p174 = scmp.eq.s32.totalorder %s21, 1
    %p175 = por %p173, %p174
    %p177 = scmp.ne.s32.totalorder %s162, %s176
    %p178 = scmp.eq.s32.totalorder %s21, 0
    %p179 = por %p177, %p178
    %s181 = sadd.s32 %s180, 1
    %p184 = scmp.eq.s32.totalorder %s15, 1
    %p185 = scmp.ne.s32.totalorder %s180, %s182
    %p186 = scmp.eq.s32.totalorder %s15, 0
    %p187 = por %p185, %p186
    %p188 = scmp.ne.s32.totalorder %s180, %s182
    %p189 = scmp.eq.s32.totalorder %s20, 1
    %p190 = por %p188, %p189
    %p191 = scmp.ne.s32.totalorder %s182, %s183
    %p192 = scmp.eq.s32.totalorder %s20, 0
    %p193 = por %p191, %p192
    %p194 = scmp.ne.s32.totalorder %s182, %s183
    %p195 = scmp.eq.s32.totalorder %s21, 1
    %p196 = por %p194, %p195
    %p198 = scmp.ne.s32.totalorder %s183, %s197
    %p199 = scmp.eq.s32.totalorder %s21, 0
    %p200 = por %p198, %p199
    %s202 = sadd.s32 %s201, 1
    %p205 = scmp.eq.s32.totalorder %s15, 1
    %p206 = scmp.ne.s32.totalorder %s201, %s203
    %p207 = scmp.eq.s32.totalorder %s15, 0
    %p208 = por %p206, %p207
    %p209 = scmp.ne.s32.totalorder %s201, %s203
    %p210 = scmp.eq.s32.totalorder %s20, 1
    %p211 = por %p209, %p210
    %p212 = scmp.ne.s32.totalorder %s203, %s204
    %p213 = scmp.eq.s32.totalorder %s20, 0
    %p214 = por %p212, %p213
    %p215 = scmp.ne.s32.totalorder %s203, %s204
    %p216 = scmp.eq.s32.totalorder %s21, 1
    %p217 = por %p215, %p216
    %p219 = scmp.ne.s32.totalorder %s204, %s218
    %p220 = scmp.eq.s32.totalorder %s21, 0
    %p221 = por %p219, %p220
    %s222 = ssub.s32 %s15, %s22
    %p223 = scmp.eq.s32.totalorder %s222, 0
    %s225 = sadd.s32 %s224, 1
    %s226 = scalar_select %p223, %s224, %s225
    %p229 = pneg %p223
    %p230 = scmp.eq.s32.totalorder %s15, 1
    %p231 = por %p229, %p230
    %p232 = scmp.ne.s32.totalorder %s224, %s227
    %p233 = scmp.eq.s32.totalorder %s15, 0
    %p234 = por %p232, %p233
    %p235 = scmp.ne.s32.totalorder %s224, %s227
    %p236 = scmp.eq.s32.totalorder %s20, 1
    %p237 = por %p235, %p236
    %p238 = scmp.ne.s32.totalorder %s227, %s228
    %p239 = scmp.eq.s32.totalorder %s20, 0
    %p240 = por %p238, %p239
    %p241 = scmp.ne.s32.totalorder %s227, %s228
    %p242 = scmp.eq.s32.totalorder %s21, 1
    %p243 = por %p241, %p242
    %p245 = scmp.ne.s32.totalorder %s228, %s244
    %p246 = scmp.eq.s32.totalorder %s21, 0
    %p247 = por %p245, %p246
    %p248 = scmp.le.s32.totalorder 1, %s15
    %p249 = scmp.lt.s32.totalorder %s15, 3
    %p250 = pnand %p248, %p249
    %p251 = pneg %p250
    // Predicated region
    $region9: #{_lambda_.3} parent=5 // pred_check
      _
    $region10: #{_lambda_.3} parent=5 // pred_check_branch
      %253 = sbr.rel (%p250) target = $region12
    $region11: #{_lambda_.3} parent=5 // pred_region
      %s254 = ssub.s32 %s15, 1
      // Predicated region
      $region13: #{_lambda_.3} parent=11 // pred_check
        %p255 = pneg %p88
      $region14: #{_lambda_.3} parent=11 // pred_check_branch
        %257 = sbr.rel (%p255) target = $region16
      $region15: #{_lambda_.3} parent=11 // pred_region
        _
      $region16: #{_lambda_.3} parent=11 // pred_fallthru
        _
      // Predicated region
      $region17: #{_lambda_.3} parent=11 // pred_check
        %p258 = pneg %p109
      $region18: #{_lambda_.3} parent=11 // pred_check_branch
        %260 = sbr.rel (%p258) target = $region20
      $region19: #{_lambda_.3} parent=11 // pred_region
        _
      $region20: #{_lambda_.3} parent=11 // pred_fallthru
        _
      // Predicated region
      $region21: #{_lambda_.3} parent=11 // pred_check
        %p261 = pneg %p130
      $region22: #{_lambda_.3} parent=11 // pred_check_branch
        %263 = sbr.rel (%p261) target = $region24
      $region23: #{_lambda_.3} parent=11 // pred_region
        _
      $region24: #{_lambda_.3} parent=11 // pred_fallthru
        _
      // Predicated region
      $region25: #{_lambda_.3} parent=11 // pred_check
        %p264 = pneg %p151
      $region26: #{_lambda_.3} parent=11 // pred_check_branch
        %266 = sbr.rel (%p264) target = $region28
      $region27: #{_lambda_.3} parent=11 // pred_region
        _
      $region28: #{_lambda_.3} parent=11 // pred_fallthru
        _
      // Predicated region
      $region29: #{_lambda_.3} parent=11 // pred_check
        %p267 = pneg %p172
      $region30: #{_lambda_.3} parent=11 // pred_check_branch
        %269 = sbr.rel (%p267) target = $region32
      $region31: #{_lambda_.3} parent=11 // pred_region
        _
      $region32: #{_lambda_.3} parent=11 // pred_fallthru
        _
      // Predicated region
      $region33: #{_lambda_.3} parent=11 // pred_check
        %p270 = pneg %p193
      $region34: #{_lambda_.3} parent=11 // pred_check_branch
        %272 = sbr.rel (%p270) target = $region36
      $region35: #{_lambda_.3} parent=11 // pred_region
        _
      $region36: #{_lambda_.3} parent=11 // pred_fallthru
        _
      // Predicated region
      $region37: #{_lambda_.3} parent=11 // pred_check
        %p273 = pneg %p214
      $region38: #{_lambda_.3} parent=11 // pred_check_branch
        %275 = sbr.rel (%p273) target = $region40
      $region39: #{_lambda_.3} parent=11 // pred_region
        _
      $region40: #{_lambda_.3} parent=11 // pred_fallthru
        _
    $region12: #{_lambda_.3} parent=5 // pred_fallthru
      _
    %p276 = scmp.lt.s32.totalorder %s15, 2
    // Predicated region
    $region41: #{_lambda_.3} parent=5 // pred_check
      %p277 = pneg %p276
    $region42: #{_lambda_.3} parent=5 // pred_check_branch
      %279 = sbr.rel (%p277) target = $region44
    $region43: #{_lambda_.3} parent=5 // pred_region
      // Predicated region
      $region45: #{_lambda_.3} parent=43 // pred_check
        %p280 = pneg %p35
      $region46: #{_lambda_.3} parent=43 // pred_check_branch
        %282 = sbr.rel (%p280) target = $region48
      $region47: #{_lambda_.3} parent=43 // pred_region
        %p283 = scmp.lt.s32.totalorder %s15, 1
        %s284 = scalar_select %p283, %s15, 1
        %s285 = smul.addr %s284, 3
        %s286 = smul.addr %s285, 8
        %s287 = scalar_lea.vmem %s0, %s286
      $region48: #{_lambda_.3} parent=43 // pred_fallthru
        _
      // Predicated region
      $region49: #{_lambda_.3} parent=43 // pred_check
        %p288 = pneg %p61
      $region50: #{_lambda_.3} parent=43 // pred_check_branch
        %290 = sbr.rel (%p288) target = $region52
      $region51: #{_lambda_.3} parent=43 // pred_region
        %p291 = scmp.lt.s32.totalorder %s15, 1
        %s292 = scalar_select %p291, %s15, 1
        %s293 = smul.addr %s292, 3
        %s294 = smul.addr %s293, 8
        %s295 = scalar_lea.vmem %s1, %s294
      $region52: #{_lambda_.3} parent=43 // pred_fallthru
        _
    $region44: #{_lambda_.3} parent=5 // pred_fallthru
      _
    %p296 = scmp.le.s32.totalorder 1, %s15
    %p297 = scmp.lt.s32.totalorder %s15, 3
    %p298 = pnand %p296, %p297
    %p299 = pneg %p298
    // Predicated region
    $region53: #{_lambda_.3} parent=5 // pred_check
      _
    $region54: #{_lambda_.3} parent=5 // pred_check_branch
      %301 = sbr.rel (%p298) target = $region56
    $region55: #{_lambda_.3} parent=5 // pred_region
      %s302 = ssub.s32 %s15, 1
      %p303 = scmp.lt.s32.totalorder %s20, 1
      %s304 = scalar_select %p303, %s20, 1
      %s305 = smul.addr %s304, 3
      %s306 = smul.addr %s305, 8
      %s307 = scalar_lea.vmem %s0, %s306
      %p308 = pneg %p41
      %p309 = pneg %p38
      %p310 = scmp.lt.s32.totalorder %s20, 1
      %s311 = scalar_select %p310, %s20, 1
      %s312 = smul.addr %s311, 3
      %s313 = smul.addr %s312, 8
      %s314 = scalar_lea.vmem %s1, %s313
      %p315 = pneg %p67
      %p316 = pneg %p64
      %p317 = pneg %p88
      %p318 = pneg %p85
      %p319 = pneg %p109
      %p320 = pneg %p106
      %p321 = pneg %p130
      %p322 = pneg %p127
      %p323 = pneg %p151
      %p324 = pneg %p148
      %p325 = pneg %p172
      %p326 = pneg %p169
      %p327 = pneg %p193
      %p328 = pneg %p190
      %p329 = pneg %p214
      %p330 = pneg %p211
      %p331 = pneg %p240
      %p332 = pneg %p237
      %p333 = scmp.lt.s32.totalorder %s20, 1
      %s334 = scalar_select %p333, %s20, 1
      %s335 = smul.addr %s334, 3
      %s336 = smul.addr %s335, 8
      %s337 = scalar_lea.vmem %s9, %s336
      %p338 = scmp.lt.s32.totalorder %s20, 1
      %s339 = scalar_select %p338, %s20, 1
      %s340 = smul.addr %s339, 3
      %s341 = smul.addr %s340, 8
      %s342 = scalar_lea.vmem %s0, %s341
      %p343 = scmp.lt.s32.totalorder %s20, 1
      %s344 = scalar_select %p343, %s20, 1
      %s345 = smul.addr %s344, 3
      %s346 = smul.addr %s345, 8
      %s347 = scalar_lea.vmem %s1, %s346
      %p348 = scmp.lt.s32.totalorder %s20, 1
      %s349 = scalar_select %p348, %s20, 1
      %s350 = smul.addr %s349, 3
      %s351 = smul.addr %s350, 8
      %s352 = scalar_lea.vmem %s9, %s351
      %v353 = vld [vmem:[%s4] sm:$0x7]
      %v354 = vld [vmem:[%s342] sm:$0xff]
      %v355 = vld [vmem:[%s342 + $0x8] sm:$0xff]
      %v356 = vld [vmem:[%s342 + $0x10] sm:$0xff]
      %v357 = vld [vmem:[%s347] sm:$0xff]
      %v358 = vld [vmem:[%s347 + $0x8] sm:$0xff]
      %v359 = vld [vmem:[%s347 + $0x10] sm:$0xff]
      %v360 = vld [vmem:[%s2] sm:$0xff]
      %vm361 = vcmask 64512
      %v363 = vsel %vm361, %v360, 0
      %365 = vmatprep.subr.mxu0 %v358
      %366 = vmatpush1.msra.mxu0 %v357
      %367 = vmatprep.subr.mxu0 0.0
      %368 = vmatpush1.msra.mxu0 0.0
      %369 = vmatprep.subr.mxu0 0.0
      %370 = vmatpush1.msra.mxu0 0.0
      %371 = vmatprep.subr.mxu0 0.0
      %372 = vmatpush1.msra.mxu0 0.0
      %373 = vmatprep.subr.mxu0 0.0
      %374 = vmatpush1.msra.mxu0 0.0
      %375 = vmatprep.subr.mxu0 0.0
      %376 = vmatpush1.msra.mxu0 0.0
      %377 = vmatprep.subr.mxu0 0.0
      %378 = vmatpush1.msra.mxu0 0.0
      %379 = vmatprep.subr.mxu0 0.0
      %380 = vmatpush1.msra.mxu0 0.0
      %381 = vmatprep.subr.mxu0 0.0
      %382 = vmatpush1.msra.mxu0 0.0
      %383 = vmatprep.subr.mxu0 0.0
      %384 = vmatpush1.msra.mxu0 0.0
      %385 = vmatprep.subr.mxu0 0.0
      %386 = vmatpush1.msra.mxu0 0.0
      %387 = vmatprep.subr.mxu0 0.0
      %388 = vmatpush1.msra.mxu0 0.0
      %389 = vmatprep.subr.mxu0 0.0
      %390 = vmatpush1.msra.mxu0 0.0
      %391 = vmatprep.subr.mxu0 0.0
      %392 = vmatpush1.msra.mxu0 0.0
      %393 = vmatprep.subr.mxu0 0.0
      %394 = vmatpush1.msra.mxu0 0.0
      %395 = vmatprep.subr.mxu0 0.0
      %396 = vmatpush1.msra.mxu0 0.0
      %397 = vmatprep.subr.mxu0 0.0
      %398 = vmatpush1.msra.mxu0 0.0
      %399 = vmatprep.subr.mxu0 0.0
      %400 = vmatpush1.msra.mxu0 0.0
      %401 = vmatprep.subr.mxu0 0.0
      %402 = vmatpush1.msra.mxu0 0.0
      %403 = vmatprep.subr.mxu0 0.0
      %404 = vmatpush1.msra.mxu0 0.0
      %405 = vmatprep.subr.mxu0 0.0
      %406 = vmatpush1.msra.mxu0 0.0
      %407 = vmatprep.subr.mxu0 0.0
      %408 = vmatpush1.msra.mxu0 0.0
      %409 = vmatprep.subr.mxu0 0.0
      %410 = vmatpush1.msra.mxu0 0.0
      %411 = vmatprep.subr.mxu0 0.0
      %412 = vmatpush1.msra.mxu0 0.0
      %413 = vmatprep.subr.mxu0 0.0
      %414 = vmatpush1.msra.mxu0 0.0
      %415 = vmatprep.subr.mxu0 0.0
      %416 = vmatpush1.msra.mxu0 0.0
      %417 = vmatprep.subr.mxu0 0.0
      %418 = vmatpush1.msra.mxu0 0.0
      %419 = vmatprep.subr.mxu0 0.0
      %420 = vmatpush1.msra.mxu0 0.0
      %421 = vmatprep.subr.mxu0 0.0
      %422 = vmatpush1.msra.mxu0 0.0
      %423 = vmatprep.subr.mxu0 0.0
      %424 = vmatpush1.msra.mxu0 0.0
      %425 = vmatprep.subr.mxu0 0.0
      %426 = vmatpush1.msra.mxu0 0.0
      %427 = vmatprep.subr.mxu0 0.0
      %428 = vmatpush1.msra.mxu0 0.0
      %429 = vmatprep.mubr.f32.mxu0 0.0
      %430 = vmatmul.mubr.f32.gmra.mrb[0].mxu0 %v363
      %v431 = vpop.f32.mrb[0].mxu0
      %v432 = vadd.f32 0.0, %v431
      %v433 = vpop.f32.mrb[0].mxu0
      %v434 = vadd.f32 0.0, %v433
      %435 = vdwg.mxu0
      %436 = vmatprep.subr.mxu0 0.0
      %437 = vmatpush1.msra.mxu0 %v359
      %438 = vmatprep.subr.mxu0 0.0
      %439 = vmatpush1.msra.mxu0 0.0
      %440 = vmatprep.subr.mxu0 0.0
      %441 = vmatpush1.msra.mxu0 0.0
      %442 = vmatprep.subr.mxu0 0.0
      %443 = vmatpush1.msra.mxu0 0.0
      %444 = vmatprep.subr.mxu0 0.0
      %445 = vmatpush1.msra.mxu0 0.0
      %446 = vmatprep.subr.mxu0 0.0
      %447 = vmatpush1.msra.mxu0 0.0
      %448 = vmatprep.subr.mxu0 0.0
      %449 = vmatpush1.msra.mxu0 0.0
      %450 = vmatprep.subr.mxu0 0.0
      %451 = vmatpush1.msra.mxu0 0.0
      %452 = vmatprep.subr.mxu0 0.0
      %453 = vmatpush1.msra.mxu0 0.0
      %454 = vmatprep.subr.mxu0 0.0
      %455 = vmatpush1.msra.mxu0 0.0
      %456 = vmatprep.subr.mxu0 0.0
      %457 = vmatpush1.msra.mxu0 0.0
      %458 = vmatprep.subr.mxu0 0.0
      %459 = vmatpush1.msra.mxu0 0.0
      %460 = vmatprep.subr.mxu0 0.0
      %461 = vmatpush1.msra.mxu0 0.0
      %462 = vmatprep.subr.mxu0 0.0
      %463 = vmatpush1.msra.mxu0 0.0
      %464 = vmatprep.subr.mxu0 0.0
      %465 = vmatpush1.msra.mxu0 0.0
      %466 = vmatprep.subr.mxu0 0.0
      %467 = vmatpush1.msra.mxu0 0.0
      %468 = vmatprep.subr.mxu0 0.0
      %469 = vmatpush1.msra.mxu0 0.0
      %470 = vmatprep.subr.mxu0 0.0
      %471 = vmatpush1.msra.mxu0 0.0
      %472 = vmatprep.subr.mxu0 0.0
      %473 = vmatpush1.msra.mxu0 0.0
      %474 = vmatprep.subr.mxu0 0.0
      %475 = vmatpush1.msra.mxu0 0.0
      %476 = vmatprep.subr.mxu0 0.0
      %477 = vmatpush1.msra.mxu0 0.0
      %478 = vmatprep.subr.mxu0 0.0
      %479 = vmatpush1.msra.mxu0 0.0
      %480 = vmatprep.subr.mxu0 0.0
      %481 = vmatpush1.msra.mxu0 0.0
      %482 = vmatprep.subr.mxu0 0.0
      %483 = vmatpush1.msra.mxu0 0.0
      %484 = vmatprep.subr.mxu0 0.0
      %485 = vmatpush1.msra.mxu0 0.0
      %486 = vmatprep.subr.mxu0 0.0
      %487 = vmatpush1.msra.mxu0 0.0
      %488 = vmatprep.subr.mxu0 0.0
      %489 = vmatpush1.msra.mxu0 0.0
      %490 = vmatprep.subr.mxu0 0.0
      %491 = vmatpush1.msra.mxu0 0.0
      %492 = vmatprep.subr.mxu0 0.0
      %493 = vmatpush1.msra.mxu0 0.0
      %494 = vmatprep.subr.mxu0 0.0
      %495 = vmatpush1.msra.mxu0 0.0
      %496 = vmatprep.subr.mxu0 0.0
      %497 = vmatpush1.msra.mxu0 0.0
      %498 = vmatprep.subr.mxu0 0.0
      %499 = vmatpush1.msra.mxu0 0.0
      %500 = vmatprep.mubr.f32.mxu0 0.0
      %501 = vmatmul.mubr.f32.gmra.mrb[0].mxu0 %v363
      %v502 = vpop.f32.mrb[0].mxu0
      %v503 = vadd.f32 0.0, %v502
      %v504 = vpop.f32.mrb[0].mxu0
      %505 = vdwg.mxu0
      %v506 = vadd.f32 %v354, %v432
      %v507 = vadd.f32 %v355, %v434
      %v508 = vadd.f32 %v356, %v503
      %v509 = vld [vmem:[%s3] sm:$0xff]
      %511 = vset.pattern.permute.xlu0 0
      %512 = vperm.xlu0 %511, %v509
      %v513 = vpop.permute.xlu0 %512
      %v515 = vadd.f32 %v506, %v513
      %v516 = vadd.f32 %v507, %v513
      %v517 = vadd.f32 %v508, %v513
      %v519 = vlaneseq
      %v520 = vshrl.u32 %v519, 7
      %v521 = vsub.s32 0, %v520
      %v522 = vrot.slane %v353, %v521
      %v523 = vlaneseq
      %v524 = vshrl.u32 %v523, 7
      %v525 = vsub.s32 1, %v524
      %v526 = vrot.slane %v353, %v525
      %v527 = vlaneseq
      %v528 = vshrl.u32 %v527, 7
      %v529 = vsub.s32 2, %v528
      %v530 = vrot.slane %v353, %v529
      %v534 = vmul.f32 %v515, %v522
      %v535 = vmul.f32 %v516, %v526
      %v536 = vmul.f32 %v517, %v530
      %v537 = vld [vmem:[%s5] sm:$0xff]
      %v538 = vld [vmem:[%s6] sm:$0xff]
      %539 = vrot.lane.b32.xlu0 %v534, 19
      %v540 = vpop.permute.xlu0 %539
      %541 = vrot.lane.b32.xlu0 %v535, 19
      %v542 = vpop.permute.xlu0 %541
      %543 = vrot.lane.b32.xlu0 %v536, 19
      %v544 = vpop.permute.xlu0 %543
      %v545 = vlaneseq
      %v546 = vand.u32 %v545, 127
      %vm547 = vcmp.lt.s32.totalorder %v546, 19
      %v548 = vsel %vm547, %v542, %v544
      %v549 = vsel %vm547, %v540, %v542
      %v550 = vsel %vm547, %v544, %v540
      %551 = vrot.lane.b32.xlu0 %v534, 18
      %v552 = vpop.permute.xlu0 %551
      %553 = vrot.lane.b32.xlu0 %v535, 18
      %v554 = vpop.permute.xlu0 %553
      %555 = vrot.lane.b32.xlu0 %v536, 18
      %v556 = vpop.permute.xlu0 %555
      %vm557 = vcmp.lt.s32.totalorder %v546, 18
      %v558 = vsel %vm557, %v554, %v556
      %v559 = vsel %vm557, %v552, %v554
      %v560 = vsel %vm557, %v556, %v552
      %561 = vrot.lane.b32.xlu0 %v534, 17
      %v562 = vpop.permute.xlu0 %561
      %563 = vrot.lane.b32.xlu0 %v535, 17
      %v564 = vpop.permute.xlu0 %563
      %565 = vrot.lane.b32.xlu0 %v536, 17
      %v566 = vpop.permute.xlu0 %565
      %vm567 = vcmp.lt.s32.totalorder %v546, 17
      %v568 = vsel %vm567, %v564, %v566
      %v569 = vsel %vm567, %v562, %v564
      %v570 = vsel %vm567, %v566, %v562
      %571 = vrot.lane.b32.xlu0 %v534, 1
      %v572 = vpop.permute.xlu0 %571
      %573 = vrot.lane.b32.xlu0 %v535, 1
      %v574 = vpop.permute.xlu0 %573
      %575 = vrot.lane.b32.xlu0 %v536, 1
      %v576 = vpop.permute.xlu0 %575
      %vm577 = vcmp.lt.s32.totalorder %v546, 1
      %v578 = vsel %vm577, %v574, %v576
      %v579 = vsel %vm577, %v572, %v574
      %v580 = vsel %vm577, %v576, %v572
      %581 = vrot.lane.b32.xlu0 %v534, 127
      %v582 = vpop.permute.xlu0 %581
      %583 = vrot.lane.b32.xlu0 %v535, 127
      %v584 = vpop.permute.xlu0 %583
      %585 = vrot.lane.b32.xlu0 %v536, 127
      %v586 = vpop.permute.xlu0 %585
      %vm587 = vcmp.lt.s32.totalorder %v546, 127
      %v588 = vsel %vm587, %v584, %v586
      %v589 = vsel %vm587, %v582, %v584
      %v590 = vsel %vm587, %v586, %v582
      %591 = vrot.lane.b32.xlu0 %v534, 111
      %v592 = vpop.permute.xlu0 %591
      %593 = vrot.lane.b32.xlu0 %v535, 111
      %v594 = vpop.permute.xlu0 %593
      %595 = vrot.lane.b32.xlu0 %v536, 111
      %v596 = vpop.permute.xlu0 %595
      %vm597 = vcmp.lt.s32.totalorder %v546, 111
      %v598 = vsel %vm597, %v594, %v596
      %v599 = vsel %vm597, %v592, %v594
      %v600 = vsel %vm597, %v596, %v592
      %601 = vrot.lane.b32.xlu0 %v534, 110
      %v602 = vpop.permute.xlu0 %601
      %603 = vrot.lane.b32.xlu0 %v535, 110
      %v604 = vpop.permute.xlu0 %603
      %605 = vrot.lane.b32.xlu0 %v536, 110
      %v606 = vpop.permute.xlu0 %605
      %vm607 = vcmp.lt.s32.totalorder %v546, 110
      %v608 = vsel %vm607, %v604, %v606
      %v609 = vsel %vm607, %v602, %v604
      %v610 = vsel %vm607, %v606, %v602
      %611 = vrot.lane.b32.xlu0 %v534, 109
      %v612 = vpop.permute.xlu0 %611
      %613 = vrot.lane.b32.xlu0 %v535, 109
      %v614 = vpop.permute.xlu0 %613
      %615 = vrot.lane.b32.xlu0 %v536, 109
      %v616 = vpop.permute.xlu0 %615
      %vm617 = vcmp.lt.s32.totalorder %v546, 109
      %v618 = vsel %vm617, %v614, %v616
      %v619 = vsel %vm617, %v612, %v614
      %v620 = vsel %vm617, %v616, %v612
      %622 = vset.pattern.permute.xlu0 0
      %623 = vperm.xlu0 %622, %v538
      %v624 = vpop.permute.xlu0 %623
      %vm626 = vcmask 588800
      %v628 = vsel %vm626, %v537, 0
      %630 = vmatprep.subr.mxu0 %v549
      %631 = vmatpush1.msra.mxu0 %v550
      %632 = vmatprep.subr.mxu0 %v559
      %633 = vmatpush1.msra.mxu0 %v560
      %634 = vmatprep.subr.mxu0 %v569
      %635 = vmatpush1.msra.mxu0 %v570
      %636 = vmatprep.subr.mxu0 %v579
      %637 = vmatpush1.msra.mxu0 %v580
      %638 = vmatprep.subr.mxu0 %v535
      %639 = vmatpush1.msra.mxu0 %v534
      %640 = vmatprep.subr.mxu0 %v588
      %641 = vmatpush1.msra.mxu0 %v589
      %642 = vmatprep.subr.mxu0 %v598
      %643 = vmatpush1.msra.mxu0 %v599
      %644 = vmatprep.subr.mxu0 %v608
      %645 = vmatpush1.msra.mxu0 %v609
      %646 = vmatprep.subr.mxu0 %v618
      %647 = vmatpush1.msra.mxu0 %v619
      %648 = vmatprep.subr.mxu0 0.0
      %649 = vmatpush1.msra.mxu0 0.0
      %650 = vmatprep.subr.mxu0 0.0
      %651 = vmatpush1.msra.mxu0 0.0
      %652 = vmatprep.subr.mxu0 0.0
      %653 = vmatpush1.msra.mxu0 0.0
      %654 = vmatprep.subr.mxu0 0.0
      %655 = vmatpush1.msra.mxu0 0.0
      %656 = vmatprep.subr.mxu0 0.0
      %657 = vmatpush1.msra.mxu0 0.0
      %658 = vmatprep.subr.mxu0 0.0
      %659 = vmatpush1.msra.mxu0 0.0
      %660 = vmatprep.subr.mxu0 0.0
      %661 = vmatpush1.msra.mxu0 0.0
      %662 = vmatprep.subr.mxu0 0.0
      %663 = vmatpush1.msra.mxu0 0.0
      %664 = vmatprep.subr.mxu0 0.0
      %665 = vmatpush1.msra.mxu0 0.0
      %666 = vmatprep.subr.mxu0 0.0
      %667 = vmatpush1.msra.mxu0 0.0
      %668 = vmatprep.subr.mxu0 0.0
      %669 = vmatpush1.msra.mxu0 0.0
      %670 = vmatprep.subr.mxu0 0.0
      %671 = vmatpush1.msra.mxu0 0.0
      %672 = vmatprep.subr.mxu0 0.0
      %673 = vmatpush1.msra.mxu0 0.0
      %674 = vmatprep.subr.mxu0 0.0
      %675 = vmatpush1.msra.mxu0 0.0
      %676 = vmatprep.subr.mxu0 0.0
      %677 = vmatpush1.msra.mxu0 0.0
      %678 = vmatprep.subr.mxu0 0.0
      %679 = vmatpush1.msra.mxu0 0.0
      %680 = vmatprep.subr.mxu0 0.0
      %681 = vmatpush1.msra.mxu0 0.0
      %682 = vmatprep.subr.mxu0 0.0
      %683 = vmatpush1.msra.mxu0 0.0
      %684 = vmatprep.subr.mxu0 0.0
      %685 = vmatpush1.msra.mxu0 0.0
      %686 = vmatprep.subr.mxu0 0.0
      %687 = vmatpush1.msra.mxu0 0.0
      %688 = vmatprep.subr.mxu0 0.0
      %689 = vmatpush1.msra.mxu0 0.0
      %690 = vmatprep.subr.mxu0 0.0
      %691 = vmatpush1.msra.mxu0 0.0
      %692 = vmatprep.subr.mxu0 0.0
      %693 = vmatpush1.msra.mxu0 0.0
      %694 = vmatprep.mubr.f32.mxu0 0.0
      %695 = vmatmul.mubr.f32.gmra.mrb[0].mxu0 %v628
      %v696 = vpop.f32.mrb[0].mxu0
      %v697 = vadd.f32 %v624, %v696
      %v698 = vpop.f32.mrb[0].mxu0
      %v699 = vadd.f32 %v624, %v698
      %700 = vdwg.mxu0
      %701 = vmatprep.subr.mxu0 0.0
      %702 = vmatpush1.msra.mxu0 %v548
      %703 = vmatprep.subr.mxu0 0.0
      %704 = vmatpush1.msra.mxu0 %v558
      %705 = vmatprep.subr.mxu0 0.0
      %706 = vmatpush1.msra.mxu0 %v568
      %707 = vmatprep.subr.mxu0 0.0
      %708 = vmatpush1.msra.mxu0 %v578
      %709 = vmatprep.subr.mxu0 0.0
      %710 = vmatpush1.msra.mxu0 %v536
      %711 = vmatprep.subr.mxu0 0.0
      %712 = vmatpush1.msra.mxu0 %v590
      %713 = vmatprep.subr.mxu0 0.0
      %714 = vmatpush1.msra.mxu0 %v600
      %715 = vmatprep.subr.mxu0 0.0
      %716 = vmatpush1.msra.mxu0 %v610
      %717 = vmatprep.subr.mxu0 0.0
      %718 = vmatpush1.msra.mxu0 %v620
      %719 = vmatprep.subr.mxu0 0.0
      %720 = vmatpush1.msra.mxu0 0.0
      %721 = vmatprep.subr.mxu0 0.0
      %722 = vmatpush1.msra.mxu0 0.0
      %723 = vmatprep.subr.mxu0 0.0
      %724 = vmatpush1.msra.mxu0 0.0
      %725 = vmatprep.subr.mxu0 0.0
      %726 = vmatpush1.msra.mxu0 0.0
      %727 = vmatprep.subr.mxu0 0.0
      %728 = vmatpush1.msra.mxu0 0.0
      %729 = vmatprep.subr.mxu0 0.0
      %730 = vmatpush1.msra.mxu0 0.0
      %731 = vmatprep.subr.mxu0 0.0
      %732 = vmatpush1.msra.mxu0 0.0
      %733 = vmatprep.subr.mxu0 0.0
      %734 = vmatpush1.msra.mxu0 0.0
      %735 = vmatprep.subr.mxu0 0.0
      %736 = vmatpush1.msra.mxu0 0.0
      %737 = vmatprep.subr.mxu0 0.0
      %738 = vmatpush1.msra.mxu0 0.0
      %739 = vmatprep.subr.mxu0 0.0
      %740 = vmatpush1.msra.mxu0 0.0
      %741 = vmatprep.subr.mxu0 0.0
      %742 = vmatpush1.msra.mxu0 0.0
      %743 = vmatprep.subr.mxu0 0.0
      %744 = vmatpush1.msra.mxu0 0.0
      %745 = vmatprep.subr.mxu0 0.0
      %746 = vmatpush1.msra.mxu0 0.0
      %747 = vmatprep.subr.mxu0 0.0
      %748 = vmatpush1.msra.mxu0 0.0
      %749 = vmatprep.subr.mxu0 0.0
      %750 = vmatpush1.msra.mxu0 0.0
      %751 = vmatprep.subr.mxu0 0.0
      %752 = vmatpush1.msra.mxu0 0.0
      %753 = vmatprep.subr.mxu0 0.0
      %754 = vmatpush1.msra.mxu0 0.0
      %755 = vmatprep.subr.mxu0 0.0
      %756 = vmatpush1.msra.mxu0 0.0
      %757 = vmatprep.subr.mxu0 0.0
      %758 = vmatpush1.msra.mxu0 0.0
      %759 = vmatprep.subr.mxu0 0.0
      %760 = vmatpush1.msra.mxu0 0.0
      %761 = vmatprep.subr.mxu0 0.0
      %762 = vmatpush1.msra.mxu0 0.0
      %763 = vmatprep.subr.mxu0 0.0
      %764 = vmatpush1.msra.mxu0 0.0
      %765 = vmatprep.mubr.f32.mxu0 0.0
      %766 = vmatmul.mubr.f32.gmra.mrb[0].mxu0 %v628
      %v767 = vpop.f32.mrb[0].mxu0
      %v768 = vadd.f32 %v624, %v767
      %v769 = vpop.f32.mrb[0].mxu0
      %770 = vdwg.mxu0
      %v771 = vmax.f32 %v697, 0.0
      %v772 = vmax.f32 %v699, 0.0
      %v773 = vmax.f32 %v768, 0.0
      %v774 = vmul.f32 %v771, %v522
      %v775 = vmul.f32 %v772, %v526
      %v776 = vmul.f32 %v773, %v530
      %v777 = vadd.f32 %v534, %v774
      %v778 = vadd.f32 %v535, %v775
      %v779 = vadd.f32 %v536, %v776
      %v780 = vadd.f32 %v774, %v777
      %v781 = vadd.f32 %v775, %v778
      %v782 = vadd.f32 %v776, %v779
      %v783 = vld [vmem:[%s7] sm:$0xff]
      %v784 = vld [vmem:[%s8] sm:$0xff]
      %786 = vset.pattern.permute.xlu0 0
      %787 = vperm.xlu0 %786, %v784
      %v788 = vpop.permute.xlu0 %787
      %v791 = vsel %vm361, %v783, 0
      %793 = vmatprep.subr.mxu0 %v781
      %794 = vmatpush1.msra.mxu0 %v780
      %795 = vmatprep.subr.mxu0 0.0
      %796 = vmatpush1.msra.mxu0 0.0
      %797 = vmatprep.subr.mxu0 0.0
      %798 = vmatpush1.msra.mxu0 0.0
      %799 = vmatprep.subr.mxu0 0.0
      %800 = vmatpush1.msra.mxu0 0.0
      %801 = vmatprep.subr.mxu0 0.0
      %802 = vmatpush1.msra.mxu0 0.0
      %803 = vmatprep.subr.mxu0 0.0
      %804 = vmatpush1.msra.mxu0 0.0
      %805 = vmatprep.subr.mxu0 0.0
      %806 = vmatpush1.msra.mxu0 0.0
      %807 = vmatprep.subr.mxu0 0.0
      %808 = vmatpush1.msra.mxu0 0.0
      %809 = vmatprep.subr.mxu0 0.0
      %810 = vmatpush1.msra.mxu0 0.0
      %811 = vmatprep.subr.mxu0 0.0
      %812 = vmatpush1.msra.mxu0 0.0
      %813 = vmatprep.subr.mxu0 0.0
      %814 = vmatpush1.msra.mxu0 0.0
      %815 = vmatprep.subr.mxu0 0.0
      %816 = vmatpush1.msra.mxu0 0.0
      %817 = vmatprep.subr.mxu0 0.0
      %818 = vmatpush1.msra.mxu0 0.0
      %819 = vmatprep.subr.mxu0 0.0
      %820 = vmatpush1.msra.mxu0 0.0
      %821 = vmatprep.subr.mxu0 0.0
      %822 = vmatpush1.msra.mxu0 0.0
      %823 = vmatprep.subr.mxu0 0.0
      %824 = vmatpush1.msra.mxu0 0.0
      %825 = vmatprep.subr.mxu0 0.0
      %826 = vmatpush1.msra.mxu0 0.0
      %827 = vmatprep.subr.mxu0 0.0
      %828 = vmatpush1.msra.mxu0 0.0
      %829 = vmatprep.subr.mxu0 0.0
      %830 = vmatpush1.msra.mxu0 0.0
      %831 = vmatprep.subr.mxu0 0.0
      %832 = vmatpush1.msra.mxu0 0.0
      %833 = vmatprep.subr.mxu0 0.0
      %834 = vmatpush1.msra.mxu0 0.0
      %835 = vmatprep.subr.mxu0 0.0
      %836 = vmatpush1.msra.mxu0 0.0
      %837 = vmatprep.subr.mxu0 0.0
      %838 = vmatpush1.msra.mxu0 0.0
      %839 = vmatprep.subr.mxu0 0.0
      %840 = vmatpush1.msra.mxu0 0.0
      %841 = vmatprep.subr.mxu0 0.0
      %842 = vmatpush1.msra.mxu0 0.0
      %843 = vmatprep.subr.mxu0 0.0
      %844 = vmatpush1.msra.mxu0 0.0
      %845 = vmatprep.subr.mxu0 0.0
      %846 = vmatpush1.msra.mxu0 0.0
      %847 = vmatprep.subr.mxu0 0.0
      %848 = vmatpush1.msra.mxu0 0.0
      %849 = vmatprep.subr.mxu0 0.0
      %850 = vmatpush1.msra.mxu0 0.0
      %851 = vmatprep.subr.mxu0 0.0
      %852 = vmatpush1.msra.mxu0 0.0
      %853 = vmatprep.subr.mxu0 0.0
      %854 = vmatpush1.msra.mxu0 0.0
      %855 = vmatprep.subr.mxu0 0.0
      %856 = vmatpush1.msra.mxu0 0.0
      %857 = vmatprep.mubr.f32.mxu0 0.0
      %858 = vmatmul.mubr.f32.gmra.mrb[0].mxu0 %v791
      %v859 = vpop.f32.mrb[0].mxu0
      %v860 = vadd.f32 %v788, %v859
      %v861 = vpop.f32.mrb[0].mxu0
      %v862 = vadd.f32 %v788, %v861
      %863 = vdwg.mxu0
      %864 = vmatprep.subr.mxu0 0.0
      %865 = vmatpush1.msra.mxu0 %v782
      %866 = vmatprep.subr.mxu0 0.0
      %867 = vmatpush1.msra.mxu0 0.0
      %868 = vmatprep.subr.mxu0 0.0
      %869 = vmatpush1.msra.mxu0 0.0
      %870 = vmatprep.subr.mxu0 0.0
      %871 = vmatpush1.msra.mxu0 0.0
      %872 = vmatprep.subr.mxu0 0.0
      %873 = vmatpush1.msra.mxu0 0.0
      %874 = vmatprep.subr.mxu0 0.0
      %875 = vmatpush1.msra.mxu0 0.0
      %876 = vmatprep.subr.mxu0 0.0
      %877 = vmatpush1.msra.mxu0 0.0
      %878 = vmatprep.subr.mxu0 0.0
      %879 = vmatpush1.msra.mxu0 0.0
      %880 = vmatprep.subr.mxu0 0.0
      %881 = vmatpush1.msra.mxu0 0.0
      %882 = vmatprep.subr.mxu0 0.0
      %883 = vmatpush1.msra.mxu0 0.0
      %884 = vmatprep.subr.mxu0 0.0
      %885 = vmatpush1.msra.mxu0 0.0
      %886 = vmatprep.subr.mxu0 0.0
      %887 = vmatpush1.msra.mxu0 0.0
      %888 = vmatprep.subr.mxu0 0.0
      %889 = vmatpush1.msra.mxu0 0.0
      %890 = vmatprep.subr.mxu0 0.0
      %891 = vmatpush1.msra.mxu0 0.0
      %892 = vmatprep.subr.mxu0 0.0
      %893 = vmatpush1.msra.mxu0 0.0
      %894 = vmatprep.subr.mxu0 0.0
      %895 = vmatpush1.msra.mxu0 0.0
      %896 = vmatprep.subr.mxu0 0.0
      %897 = vmatpush1.msra.mxu0 0.0
      %898 = vmatprep.subr.mxu0 0.0
      %899 = vmatpush1.msra.mxu0 0.0
      %900 = vmatprep.subr.mxu0 0.0
      %901 = vmatpush1.msra.mxu0 0.0
      %902 = vmatprep.subr.mxu0 0.0
      %903 = vmatpush1.msra.mxu0 0.0
      %904 = vmatprep.subr.mxu0 0.0
      %905 = vmatpush1.msra.mxu0 0.0
      %906 = vmatprep.subr.mxu0 0.0
      %907 = vmatpush1.msra.mxu0 0.0
      %908 = vmatprep.subr.mxu0 0.0
      %909 = vmatpush1.msra.mxu0 0.0
      %910 = vmatprep.subr.mxu0 0.0
      %911 = vmatpush1.msra.mxu0 0.0
      %912 = vmatprep.subr.mxu0 0.0
      %913 = vmatpush1.msra.mxu0 0.0
      %914 = vmatprep.subr.mxu0 0.0
      %915 = vmatpush1.msra.mxu0 0.0
      %916 = vmatprep.subr.mxu0 0.0
      %917 = vmatpush1.msra.mxu0 0.0
      %918 = vmatprep.subr.mxu0 0.0
      %919 = vmatpush1.msra.mxu0 0.0
      %920 = vmatprep.subr.mxu0 0.0
      %921 = vmatpush1.msra.mxu0 0.0
      %922 = vmatprep.subr.mxu0 0.0
      %923 = vmatpush1.msra.mxu0 0.0
      %924 = vmatprep.subr.mxu0 0.0
      %925 = vmatpush1.msra.mxu0 0.0
      %926 = vmatprep.subr.mxu0 0.0
      %927 = vmatpush1.msra.mxu0 0.0
      %928 = vmatprep.mubr.f32.mxu0 0.0
      %929 = vmatmul.mubr.f32.gmra.mrb[0].mxu0 %v791
      %v930 = vpop.f32.mrb[0].mxu0
      %v931 = vadd.f32 %v788, %v930
      %v932 = vpop.f32.mrb[0].mxu0
      %933 = vdwg.mxu0
      %v934 = vmax.f32 %v860, 0.0
      %v935 = vmax.f32 %v862, 0.0
      %v936 = vmax.f32 %v931, 0.0
      %v937 = vmul.f32 %v934, %v522
      %v938 = vmul.f32 %v935, %v526
      %v939 = vmul.f32 %v936, %v530
      %v940 = vadd.f32 %v777, %v937
      %v941 = vadd.f32 %v778, %v938
      %v942 = vadd.f32 %v779, %v939
      %943 = vst [vmem:[%s352] sm:$0xff] %v940
      %944 = vst [vmem:[%s352 + $0x8] sm:$0xff] %v941
      %945 = vst [vmem:[%s352 + $0x10] sm:$0xff] %v942
      %p946 = scmp.lt.s32.totalorder %s20, 1
      %s947 = scalar_select %p946, %s20, 1
      %s948 = smul.addr %s947, 3
      %s949 = smul.addr %s948, 8
      %s950 = scalar_lea.vmem %s9, %s949
      // Predicated region
      $region57: #{_lambda_.3} parent=55 // pred_check
        %p951 = pneg %p237
      $region58: #{_lambda_.3} parent=55 // pred_check_branch
        %953 = sbr.rel (%p951) target = $region60
      $region59: #{_lambda_.3} parent=55 // pred_region
        _
      $region60: #{_lambda_.3} parent=55 // pred_fallthru
        _
    $region56: #{_lambda_.3} parent=5 // pred_fallthru
      _
    %p954 = scmp.le.s32.totalorder 2, %s15
    // Predicated region
    $region61: #{_lambda_.3} parent=5 // pred_check
      %p955 = pneg %p954
    $region62: #{_lambda_.3} parent=5 // pred_check_branch
      %957 = sbr.rel (%p955) target = $region64
    $region63: #{_lambda_.3} parent=5 // pred_region
      %s958 = ssub.s32 %s15, 2
      // Predicated region
      $region65: #{_lambda_.3} parent=63 // pred_check
        %p959 = pneg %p243
      $region66: #{_lambda_.3} parent=63 // pred_check_branch
        %961 = sbr.rel (%p959) target = $region68
      $region67: #{_lambda_.3} parent=63 // pred_region
        %p962 = scmp.lt.s32.totalorder %s21, 1
        %s963 = scalar_select %p962, %s21, 1
        %s964 = smul.addr %s963, 3
        %s965 = smul.addr %s964, 8
        %s966 = scalar_lea.vmem %s9, %s965
      $region68: #{_lambda_.3} parent=63 // pred_fallthru
        _
    $region64: #{_lambda_.3} parent=5 // pred_fallthru
      _
  $region6: #{_lambda_.3} parent=0 // loop_footer
    %s19 = sadd.s32 1, %s15
  $region7: #{_lambda_.3} parent=0 // loop_footer_branch
    %14 = sbr.rel target = $region3
  $region8: #{_lambda_.3} parent=0 // loop_exit
    _

</llo_original>
